<compile_context>
chip_gen: v7x
topology: tpu7x:2x2x1
jax: 0.10.0
libtpu: 0.0.40
codegen_flags: <defaults>
</compile_context>

<pallas_src>
import functools

import jax
import jax.numpy as jnp
import numpy as np
from jax.experimental import pallas as pl
from jax.experimental.pallas import tpu as pltpu


# ----------------------------- Fused kernel ---------------------------------
def _fused_lstm_head_kernel(L, H, T, B, V, offs, widths,
                            x_ref, wstack_ref, bstack_ref,
                            w1_ref, b1_ref, w2_ref, b2_ref, out_ref):
    f32 = jnp.float32
    k_total = offs[-1] + widths[-1]

    # Loop-invariant weight/bias loads (one VMEM read each; regalloc may
    # rematerialize from VMEM under pressure, which is fine).
    w_all = wstack_ref[...]            # (K_total, 4H): per-layer [W_ih; W_hh] block-rows
    b_all = bstack_ref[...]            # (L*B, 4H): per-layer bias broadcast over B rows

    def lstm_math(x_mat, w, bias, c_prev):
        """One (possibly layer-stacked) LSTM cell update.
        x_mat: (R, K)  w: (K, 4H)  bias: (R, 4H)  c_prev: (R, H)."""
        gates = jnp.dot(x_mat, w, preferred_element_type=f32) + bias   # (R, 4H) [i|f|o|g]
        # Full-slab sigmoid/tanh + one lane-masked select: EUP slot is otherwise
        # idle and this avoids activating mid-vreg sub-slices.
        lane = jax.lax.broadcasted_iota(jnp.int32, gates.shape, 1)
        act = jnp.where(lane < 3 * H, jax.nn.sigmoid(gates), jnp.tanh(gates))
        i_g = act[:, 0 * H:1 * H]
        f_g = act[:, 1 * H:2 * H]
        o_g = act[:, 2 * H:3 * H]
        g_g = act[:, 3 * H:4 * H]
        c_new = f_g * c_prev + i_g * g_g
        h_new = o_g * jnp.tanh(c_new)
        return h_new, c_new

    zero_state = jnp.zeros((B, H), f32)
    h = [zero_state] * L               # per-layer hidden state, carried in vregs
    c = [zero_state] * L               # per-layer cell state,   carried in vregs
    ys = [None] * T                    # top-layer hidden per time step

    # Wavefront schedule: at wavefront s, layer l processes t = s - l.  All
    # active (layer, t) pairs within a wavefront are mutually independent, so
    # the serial dependency chain is T + L - 1 cells.  Interior wavefronts fuse
    # all L cells into one block-diagonal matmul + one stacked elementwise slab.
    for s in range(T + L - 1):
        active = [l for l in range(L) if 0 <= s - l < T]
        # Per-layer inputs, read from the *previous* wavefront's state.
        inp = {l: (x_ref[s] if l == 0 else h[l - 1]) for l in active}

        if len(active) == L and L > 1:
            # Interior wavefront: one block-diagonal stacked cell over all layers.
            blocks = []
            for l in range(L):
                pieces = []
                if offs[l] > 0:
                    pieces.append(jnp.zeros((B, offs[l]), f32))
                pieces.append(inp[l])
                pieces.append(h[l])
                pad = k_total - offs[l] - widths[l]
                if pad > 0:
                    pieces.append(jnp.zeros((B, pad), f32))
                blocks.append(jnp.concatenate(pieces, axis=1))        # (B, K_total)
            x_stack = jnp.concatenate(blocks, axis=0)                 # (L*B, K_total)
            c_stack = jnp.concatenate(c, axis=0)                      # (L*B, H)
            h_new, c_new = lstm_math(x_stack, w_all, b_all, c_stack)
            h = [h_new[l * B:(l + 1) * B] for l in range(L)]
            c = [c_new[l * B:(l + 1) * B] for l in range(L)]
        else:
            # Boundary wavefronts: plain per-layer cells for the active subset.
            for l in active:
                x_cat = jnp.concatenate([inp[l], h[l]], axis=1)       # (B, widths[l])
                w_l = wstack_ref[offs[l]:offs[l] + widths[l], :]      # static sub-load
                b_l = b_all[l * B:(l + 1) * B, :]
                h[l], c[l] = lstm_math(x_cat, w_l, b_l, c[l])

        t_top = s - (L - 1)
        if 0 <= t_top < T:
            ys[t_top] = h[L - 1]

    # ----- Head: linear1 + ReLU over all (t, b) rows in one matmul, linear2 as
    #       a single pre-permuted block-diagonal matmul, one contiguous store. --
    y_tm = jnp.concatenate(ys, axis=0)                                # (T*B, H), row = t*B + b
    a1 = jnp.maximum(
        jnp.dot(y_tm, w1_ref[...], preferred_element_type=f32) + b1_ref[...], 0.0)  # (T*B, V)
    out = jnp.dot(w2_ref[...], a1, preferred_element_type=f32) + b2_ref[...]        # (B*Hn, V)
    out_ref[...] = out


# ------------------------------ Wrapper --------------------------------------
def _reorder_gate_cols(w, H):
    """PyTorch LSTM gate column order [i, f, g, o] -> [i, f, o, g] (last axis)."""
    return jnp.concatenate(
        [w[..., :2 * H], w[..., 3 * H:4 * H], w[..., 2 * H:3 * H]], axis=-1)


def lstm_model_forward(x, params):
    """x: (B, lookback, num_vars) batch-first, like the PyTorch module."""
    H = params["hidden_dim"]
    H4 = 4 * H
    x_tm = jnp.transpose(x, (1, 0, 2)).astype(jnp.float32)    # (T, B, V), tiny
    T, B, V = x_tm.shape
    L = len(params["lstm"])
    Hn = params["w2t"].shape[0]

    # Per-layer fused [W_ih; W_hh] with gate columns permuted to [i|f|o|g],
    # stacked vertically into one (K_total, 4H) block-row weight; biases
    # broadcast to (B, 4H) per layer and stacked to (L*B, 4H).
    wcat, brows, offs, widths = [], [], [], []
    off = 0
    for (w_ih, w_hh, b) in params["lstm"]:
        w_l = jnp.concatenate([_reorder_gate_cols(w_ih, H),
                               _reorder_gate_cols(w_hh, H)], axis=0)   # (in_l + H, 4H)
        wcat.append(w_l)
        brows.append(jnp.broadcast_to(_reorder_gate_cols(b, H), (B, H4)))
        offs.append(off)
        widths.append(w_l.shape[0])
        off += w_l.shape[0]
    w_stack = jnp.concatenate(wcat, axis=0)                   # (K_total, 4H)
    b_stack = jnp.concatenate(brows, axis=0)                  # (L*B, 4H)

    # linear2 folded over the batch: block-diagonal weight whose columns are
    # permuted to the kernel's time-major (t*B + b) row order; bias tiled.
    w2t = params["w2t"].astype(jnp.float32)                   # (Hn, T)
    w2_tm = (jnp.eye(B, dtype=jnp.float32)[:, None, None, :]
             * w2t[None, :, :, None]).reshape(B * Hn, T * B)  # (B*Hn, T*B)
    b2_tm = jnp.tile(params["b2"].astype(jnp.float32), (B, 1))  # (B*Hn, 1)

    w1 = params["w1"].astype(jnp.float32)
    b1 = params["b1"].astype(jnp.float32)

    in_specs = [
        pl.BlockSpec((T, B, V), lambda i: (0, 0, 0)),
        pl.BlockSpec(w_stack.shape, lambda i: (0, 0)),
        pl.BlockSpec(b_stack.shape, lambda i: (0, 0)),
        pl.BlockSpec(w1.shape, lambda i: (0, 0)),
        pl.BlockSpec(b1.shape, lambda i: (0, 0)),
        pl.BlockSpec(w2_tm.shape, lambda i: (0, 0)),
        pl.BlockSpec(b2_tm.shape, lambda i: (0, 0)),
    ]

    kernel = functools.partial(_fused_lstm_head_kernel, L, H, T, B, V,
                               tuple(offs), tuple(widths))
    out = pl.pallas_call(
        kernel,
        out_shape=jax.ShapeDtypeStruct((B * Hn, V), jnp.float32),
        grid_spec=pltpu.PrefetchScalarGridSpec(
            num_scalar_prefetch=0,
            grid=(1,),
            in_specs=in_specs,
            out_specs=pl.BlockSpec((B * Hn, V), lambda i: (0, 0)),
        ),
        compiler_params=pltpu.CompilerParams(
            dimension_semantics=("arbitrary",),
            vmem_limit_bytes=2 * 1024 * 1024,     # actual footprint < 120 KiB
        ),
    )(x_tm, w_stack, b_stack, w1, b1, w2_tm, b2_tm)
    return out.reshape(B, Hn, V)


# --------------------------- Pure-JAX reference ------------------------------
def reference_forward(x, params):
    H = params["hidden_dim"]
    B, T, V = x.shape

    def lstm_layer(seq, w_ih, w_hh, b):
        def step(carry, xt):
            h, c = carry
            gates = xt @ w_ih + h @ w_hh + b[0]
            i = jax.nn.sigmoid(gates[:, :H])
            f = jax.nn.sigmoid(gates[:, H:2 * H])
            g = jnp.tanh(gates[:, 2 * H:3 * H])
            o = jax.nn.sigmoid(gates[:, 3 * H:])
            c = f * c + i * g
            h = o * jnp.tanh(c)
            return (h, c), h
        init = (jnp.zeros((B, H), jnp.float32), jnp.zeros((B, H), jnp.float32))
        _, ys = jax.lax.scan(step, init, seq)
        return ys

    seq = jnp.transpose(x, (1, 0, 2)).astype(jnp.float32)     # (T, B, V)
    for (w_ih, w_hh, b) in params["lstm"]:
        seq = lstm_layer(seq, w_ih, w_hh, b)
    out = jnp.transpose(seq, (1, 0, 2))                       # (B, T, H)
    y = jnp.maximum(out @ params["w1"] + params["b1"][0], 0.0)        # (B, T, V)
    z = jnp.einsum("btv,ht->bhv", y, params["w2t"])                   # (B, horizon, V)
    z = z + params["b2"][:, 0][None, :, None]
    return z


# ------------------------------- Param init ---------------------------------
def init_params(key, num_vars, lookback, horizon, hidden_dim, num_layers):
    H = hidden_dim
    params = {"hidden_dim": H, "lstm": []}
    for l in range(num_layers):
        in_dim = num_vars if l == 0 else H
        key, k1, k2, k3, k4 = jax.random.split(key, 5)
        scale = 1.0 / np.sqrt(H)
        w_ih = jax.random.uniform(k1, (in_dim, 4 * H), jnp.float32, -scale, scale)
        w_hh = jax.random.uniform(k2, (H, 4 * H), jnp.float32, -scale, scale)
        b_ih = jax.random.uniform(k3, (4 * H,), jnp.float32, -scale, scale)
        b_hh = jax.random.uniform(k4, (4 * H,), jnp.float32, -scale, scale)
        params["lstm"].append((w_ih, w_hh, (b_ih + b_hh).reshape(1, 4 * H)))
    key, k1, k2, k3, k4 = jax.random.split(key, 5)
    params["w1"] = jax.random.uniform(k1, (H, num_vars), jnp.float32, -0.1, 0.1)
    params["b1"] = jax.random.uniform(k2, (1, num_vars), jnp.float32, -0.1, 0.1)
    params["w2t"] = jax.random.uniform(k3, (horizon, lookback), jnp.float32, -0.1, 0.1)
    params["b2"] = jax.random.uniform(k4, (horizon, 1), jnp.float32, -0.1, 0.1)
    return params


if __name__ == "__main__":
    num_vars, lookback, horizon = 4, 8, 4
    hidden_dim, num_layers, batch = 32, 2, 2

    key = jax.random.PRNGKey(0)
    key, kx = jax.random.split(key)
    x = jax.random.normal(kx, (batch, lookback, num_vars), jnp.float32)
    params = init_params(key, num_vars, lookback, horizon, hidden_dim, num_layers)

    out = jax.block_until_ready(lstm_model_forward(x, params))
    ref = jax.block_until_ready(reference_forward(x, params))

    assert out.shape == (batch, horizon, num_vars), out.shape
    np.testing.assert_allclose(np.asarray(out), np.asarray(ref), rtol=1e-4, atol=1e-4)
    print("KERNEL_OK")
</pallas_src>

<mosaic_0001>
module attributes {stable_mosaic.version = 11 : i64} {
  func.func @_fused_lstm_head_kernel(%arg0: i32, %arg1: memref<8x2x4xf32, #tpu.memory_space<vmem>>, %arg2: memref<100x128xf32, #tpu.memory_space<vmem>>, %arg3: memref<4x128xf32, #tpu.memory_space<vmem>>, %arg4: memref<32x4xf32, #tpu.memory_space<vmem>>, %arg5: memref<1x4xf32, #tpu.memory_space<vmem>>, %arg6: memref<8x16xf32, #tpu.memory_space<vmem>>, %arg7: memref<8x1xf32, #tpu.memory_space<vmem>>, %arg8: memref<8x4xf32, #tpu.memory_space<vmem>>) attributes {dimension_semantics = [#tpu.dimension_semantics<arbitrary>], iteration_bounds = array<i64: 1>, scalar_prefetch = 0 : i64, scratch_operands = 0 : i64, tpu.core_type = #tpu.core_type<tc>, window_params = [{pipeline_mode = #tpu.pipeline_mode<synchronous>, transform_indices = @transform_0, window_bounds = array<i64: 8, 2, 4>}, {pipeline_mode = #tpu.pipeline_mode<synchronous>, transform_indices = @transform_1, window_bounds = array<i64: 100, 128>}, {pipeline_mode = #tpu.pipeline_mode<synchronous>, transform_indices = @transform_2, window_bounds = array<i64: 4, 128>}, {pipeline_mode = #tpu.pipeline_mode<synchronous>, transform_indices = @transform_3, window_bounds = array<i64: 32, 4>}, {pipeline_mode = #tpu.pipeline_mode<synchronous>, transform_indices = @transform_4, window_bounds = array<i64: 1, 4>}, {pipeline_mode = #tpu.pipeline_mode<synchronous>, transform_indices = @transform_5, window_bounds = array<i64: 8, 16>}, {pipeline_mode = #tpu.pipeline_mode<synchronous>, transform_indices = @transform_6, window_bounds = array<i64: 8, 1>}, {pipeline_mode = #tpu.pipeline_mode<synchronous>, transform_indices = @transform_7, window_bounds = array<i64: 8, 4>}]} {
    %c0 = arith.constant 0 : index
    %c0_0 = arith.constant 0 : index
    %0 = vector.load %arg2[%c0, %c0_0] : memref<100x128xf32, #tpu.memory_space<vmem>>, vector<100x128xf32>
    %c0_1 = arith.constant 0 : index
    %c0_2 = arith.constant 0 : index
    %1 = vector.load %arg3[%c0_1, %c0_2] : memref<4x128xf32, #tpu.memory_space<vmem>>, vector<4x128xf32>
    %cst = arith.constant 0.000000e+00 : f32
    %2 = vector.broadcast %cst : f32 to vector<2x32xf32>
    %c0_3 = arith.constant 0 : index
    %c0_4 = arith.constant 0 : index
    %c0_5 = arith.constant 0 : index
    %3 = vector.load %arg1[%c0_3, %c0_4, %c0_5] : memref<8x2x4xf32, #tpu.memory_space<vmem>>, vector<1x2x4xf32>
    %4 = vector.shape_cast %3 : vector<1x2x4xf32> to vector<2x4xf32>
    %5 = tpu.concatenate %4, %2 in 1 : vector<2x4xf32>, vector<2x32xf32> -> vector<2x36xf32>
    %c0_6 = arith.constant 0 : index
    %c0_7 = arith.constant 0 : index
    %6 = vector.load %arg2[%c0_6, %c0_7] : memref<100x128xf32, #tpu.memory_space<vmem>>, vector<36x128xf32>
    %7 = vector.extract_strided_slice %1 {offsets = [0, 0], sizes = [2, 128], strides = [1, 1]} : vector<4x128xf32> to vector<2x128xf32>
    %cst_8 = arith.constant dense<0.000000e+00> : vector<2x128xf32>
    %8 = tpu.matmul %5, %6, %cst_8 {dimension_numbers = #tpu.dot_dimension_numbers<[1], [0], [0], [1], [0, 0, 1, 1], [], []>} : vector<2x36xf32>, vector<36x128xf32>, vector<2x128xf32> -> vector<2x128xf32>
    %9 = arith.addf %8, %7 : vector<2x128xf32>
    %10 = tpu.iota {dimensions = array<i32: 1>} : vector<2x128xi32>
    %c96_i32 = arith.constant 96 : i32
    %11 = vector.broadcast %c96_i32 : i32 to vector<2x128xi32>
    %12 = arith.cmpi slt, %10, %11 : vector<2x128xi32>
    %13 = arith.negf %9 : vector<2x128xf32>
    %14 = math.exp %13 : vector<2x128xf32>
    %cst_9 = arith.constant 1.000000e+00 : f32
    %15 = vector.broadcast %cst_9 : f32 to vector<2x128xf32>
    %16 = arith.addf %15, %14 : vector<2x128xf32>
    %17 = arith.divf %15, %16 : vector<2x128xf32>
    %18 = math.tanh %9 : vector<2x128xf32>
    %19 = arith.select %12, %17, %18 : vector<2x128xi1>, vector<2x128xf32>
    %20 = vector.extract_strided_slice %19 {offsets = [0, 0], sizes = [2, 32], strides = [1, 1]} : vector<2x128xf32> to vector<2x32xf32>
    %21 = vector.extract_strided_slice %19 {offsets = [0, 32], sizes = [2, 32], strides = [1, 1]} : vector<2x128xf32> to vector<2x32xf32>
    %22 = vector.extract_strided_slice %19 {offsets = [0, 64], sizes = [2, 32], strides = [1, 1]} : vector<2x128xf32> to vector<2x32xf32>
    %23 = vector.extract_strided_slice %19 {offsets = [0, 96], sizes = [2, 32], strides = [1, 1]} : vector<2x128xf32> to vector<2x32xf32>
    %24 = arith.mulf %21, %2 : vector<2x32xf32>
    %25 = arith.mulf %20, %23 : vector<2x32xf32>
    %26 = arith.addf %24, %25 : vector<2x32xf32>
    %27 = math.tanh %26 : vector<2x32xf32>
    %28 = arith.mulf %22, %27 : vector<2x32xf32>
    %c1 = arith.constant 1 : index
    %c0_10 = arith.constant 0 : index
    %c0_11 = arith.constant 0 : index
    %29 = vector.load %arg1[%c1, %c0_10, %c0_11] : memref<8x2x4xf32, #tpu.memory_space<vmem>>, vector<1x2x4xf32>
    %30 = vector.shape_cast %29 : vector<1x2x4xf32> to vector<2x4xf32>
    %cst_12 = arith.constant 0.000000e+00 : f32
    %31 = vector.broadcast %cst_12 : f32 to vector<2x64xf32>
    %32 = tpu.concatenate %30, %28, %31 in 1 : vector<2x4xf32>, vector<2x32xf32>, vector<2x64xf32> -> vector<2x100xf32>
    %cst_13 = arith.constant 0.000000e+00 : f32
    %33 = vector.broadcast %cst_13 : f32 to vector<2x36xf32>
    %34 = tpu.concatenate %33, %28, %2 in 1 : vector<2x36xf32>, vector<2x32xf32>, vector<2x32xf32> -> vector<2x100xf32>
    %35 = tpu.concatenate %32, %34 in 0 : vector<2x100xf32>, vector<2x100xf32> -> vector<4x100xf32>
    %36 = tpu.concatenate %26, %2 in 0 : vector<2x32xf32>, vector<2x32xf32> -> vector<4x32xf32>
    %cst_14 = arith.constant dense<0.000000e+00> : vector<4x128xf32>
    %37 = tpu.matmul %35, %0, %cst_14 {dimension_numbers = #tpu.dot_dimension_numbers<[1], [0], [0], [1], [0, 0, 1, 1], [], []>} : vector<4x100xf32>, vector<100x128xf32>, vector<4x128xf32> -> vector<4x128xf32>
    %38 = arith.addf %37, %1 : vector<4x128xf32>
    %39 = tpu.iota {dimensions = array<i32: 1>} : vector<4x128xi32>
    %c96_i32_15 = arith.constant 96 : i32
    %40 = vector.broadcast %c96_i32_15 : i32 to vector<4x128xi32>
    %41 = arith.cmpi slt, %39, %40 : vector<4x128xi32>
    %42 = arith.negf %38 : vector<4x128xf32>
    %43 = math.exp %42 : vector<4x128xf32>
    %cst_16 = arith.constant 1.000000e+00 : f32
    %44 = vector.broadcast %cst_16 : f32 to vector<4x128xf32>
    %45 = arith.addf %44, %43 : vector<4x128xf32>
    %46 = arith.divf %44, %45 : vector<4x128xf32>
    %47 = math.tanh %38 : vector<4x128xf32>
    %48 = arith.select %41, %46, %47 : vector<4x128xi1>, vector<4x128xf32>
    %49 = vector.extract_strided_slice %48 {offsets = [0, 0], sizes = [4, 32], strides = [1, 1]} : vector<4x128xf32> to vector<4x32xf32>
    %50 = vector.extract_strided_slice %48 {offsets = [0, 32], sizes = [4, 32], strides = [1, 1]} : vector<4x128xf32> to vector<4x32xf32>
    %51 = vector.extract_strided_slice %48 {offsets = [0, 64], sizes = [4, 32], strides = [1, 1]} : vector<4x128xf32> to vector<4x32xf32>
    %52 = vector.extract_strided_slice %48 {offsets = [0, 96], sizes = [4, 32], strides = [1, 1]} : vector<4x128xf32> to vector<4x32xf32>
    %53 = arith.mulf %50, %36 : vector<4x32xf32>
    %54 = arith.mulf %49, %52 : vector<4x32xf32>
    %55 = arith.addf %53, %54 : vector<4x32xf32>
    %56 = math.tanh %55 : vector<4x32xf32>
    %57 = arith.mulf %51, %56 : vector<4x32xf32>
    %58 = vector.extract_strided_slice %57 {offsets = [0, 0], sizes = [2, 32], strides = [1, 1]} : vector<4x32xf32> to vector<2x32xf32>
    %59 = vector.extract_strided_slice %57 {offsets = [2, 0], sizes = [2, 32], strides = [1, 1]} : vector<4x32xf32> to vector<2x32xf32>
    %60 = vector.extract_strided_slice %55 {offsets = [0, 0], sizes = [2, 32], strides = [1, 1]} : vector<4x32xf32> to vector<2x32xf32>
    %61 = vector.extract_strided_slice %55 {offsets = [2, 0], sizes = [2, 32], strides = [1, 1]} : vector<4x32xf32> to vector<2x32xf32>
    %c2 = arith.constant 2 : index
    %c0_17 = arith.constant 0 : index
    %c0_18 = arith.constant 0 : index
    %62 = vector.load %arg1[%c2, %c0_17, %c0_18] : memref<8x2x4xf32, #tpu.memory_space<vmem>>, vector<1x2x4xf32>
    %63 = vector.shape_cast %62 : vector<1x2x4xf32> to vector<2x4xf32>
    %cst_19 = arith.constant 0.000000e+00 : f32
    %64 = vector.broadcast %cst_19 : f32 to vector<2x64xf32>
    %65 = tpu.concatenate %63, %58, %64 in 1 : vector<2x4xf32>, vector<2x32xf32>, vector<2x64xf32> -> vector<2x100xf32>
    %cst_20 = arith.constant 0.000000e+00 : f32
    %66 = vector.broadcast %cst_20 : f32 to vector<2x36xf32>
    %67 = tpu.concatenate %66, %58, %59 in 1 : vector<2x36xf32>, vector<2x32xf32>, vector<2x32xf32> -> vector<2x100xf32>
    %68 = tpu.concatenate %65, %67 in 0 : vector<2x100xf32>, vector<2x100xf32> -> vector<4x100xf32>
    %69 = tpu.concatenate %60, %61 in 0 : vector<2x32xf32>, vector<2x32xf32> -> vector<4x32xf32>
    %cst_21 = arith.constant dense<0.000000e+00> : vector<4x128xf32>
    %70 = tpu.matmul %68, %0, %cst_21 {dimension_numbers = #tpu.dot_dimension_numbers<[1], [0], [0], [1], [0, 0, 1, 1], [], []>} : vector<4x100xf32>, vector<100x128xf32>, vector<4x128xf32> -> vector<4x128xf32>
    %71 = arith.addf %70, %1 : vector<4x128xf32>
    %72 = tpu.iota {dimensions = array<i32: 1>} : vector<4x128xi32>
    %c96_i32_22 = arith.constant 96 : i32
    %73 = vector.broadcast %c96_i32_22 : i32 to vector<4x128xi32>
    %74 = arith.cmpi slt, %72, %73 : vector<4x128xi32>
    %75 = arith.negf %71 : vector<4x128xf32>
    %76 = math.exp %75 : vector<4x128xf32>
    %cst_23 = arith.constant 1.000000e+00 : f32
    %77 = vector.broadcast %cst_23 : f32 to vector<4x128xf32>
    %78 = arith.addf %77, %76 : vector<4x128xf32>
    %79 = arith.divf %77, %78 : vector<4x128xf32>
    %80 = math.tanh %71 : vector<4x128xf32>
    %81 = arith.select %74, %79, %80 : vector<4x128xi1>, vector<4x128xf32>
    %82 = vector.extract_strided_slice %81 {offsets = [0, 0], sizes = [4, 32], strides = [1, 1]} : vector<4x128xf32> to vector<4x32xf32>
    %83 = vector.extract_strided_slice %81 {offsets = [0, 32], sizes = [4, 32], strides = [1, 1]} : vector<4x128xf32> to vector<4x32xf32>
    %84 = vector.extract_strided_slice %81 {offsets = [0, 64], sizes = [4, 32], strides = [1, 1]} : vector<4x128xf32> to vector<4x32xf32>
    %85 = vector.extract_strided_slice %81 {offsets = [0, 96], sizes = [4, 32], strides = [1, 1]} : vector<4x128xf32> to vector<4x32xf32>
    %86 = arith.mulf %83, %69 : vector<4x32xf32>
    %87 = arith.mulf %82, %85 : vector<4x32xf32>
    %88 = arith.addf %86, %87 : vector<4x32xf32>
    %89 = math.tanh %88 : vector<4x32xf32>
    %90 = arith.mulf %84, %89 : vector<4x32xf32>
    %91 = vector.extract_strided_slice %90 {offsets = [0, 0], sizes = [2, 32], strides = [1, 1]} : vector<4x32xf32> to vector<2x32xf32>
    %92 = vector.extract_strided_slice %90 {offsets = [2, 0], sizes = [2, 32], strides = [1, 1]} : vector<4x32xf32> to vector<2x32xf32>
    %93 = vector.extract_strided_slice %88 {offsets = [0, 0], sizes = [2, 32], strides = [1, 1]} : vector<4x32xf32> to vector<2x32xf32>
    %94 = vector.extract_strided_slice %88 {offsets = [2, 0], sizes = [2, 32], strides = [1, 1]} : vector<4x32xf32> to vector<2x32xf32>
    %c3 = arith.constant 3 : index
    %c0_24 = arith.constant 0 : index
    %c0_25 = arith.constant 0 : index
    %95 = vector.load %arg1[%c3, %c0_24, %c0_25] : memref<8x2x4xf32, #tpu.memory_space<vmem>>, vector<1x2x4xf32>
    %96 = vector.shape_cast %95 : vector<1x2x4xf32> to vector<2x4xf32>
    %cst_26 = arith.constant 0.000000e+00 : f32
    %97 = vector.broadcast %cst_26 : f32 to vector<2x64xf32>
    %98 = tpu.concatenate %96, %91, %97 in 1 : vector<2x4xf32>, vector<2x32xf32>, vector<2x64xf32> -> vector<2x100xf32>
    %cst_27 = arith.constant 0.000000e+00 : f32
    %99 = vector.broadcast %cst_27 : f32 to vector<2x36xf32>
    %100 = tpu.concatenate %99, %91, %92 in 1 : vector<2x36xf32>, vector<2x32xf32>, vector<2x32xf32> -> vector<2x100xf32>
    %101 = tpu.concatenate %98, %100 in 0 : vector<2x100xf32>, vector<2x100xf32> -> vector<4x100xf32>
    %102 = tpu.concatenate %93, %94 in 0 : vector<2x32xf32>, vector<2x32xf32> -> vector<4x32xf32>
    %cst_28 = arith.constant dense<0.000000e+00> : vector<4x128xf32>
    %103 = tpu.matmul %101, %0, %cst_28 {dimension_numbers = #tpu.dot_dimension_numbers<[1], [0], [0], [1], [0, 0, 1, 1], [], []>} : vector<4x100xf32>, vector<100x128xf32>, vector<4x128xf32> -> vector<4x128xf32>
    %104 = arith.addf %103, %1 : vector<4x128xf32>
    %105 = tpu.iota {dimensions = array<i32: 1>} : vector<4x128xi32>
    %c96_i32_29 = arith.constant 96 : i32
    %106 = vector.broadcast %c96_i32_29 : i32 to vector<4x128xi32>
    %107 = arith.cmpi slt, %105, %106 : vector<4x128xi32>
    %108 = arith.negf %104 : vector<4x128xf32>
    %109 = math.exp %108 : vector<4x128xf32>
    %cst_30 = arith.constant 1.000000e+00 : f32
    %110 = vector.broadcast %cst_30 : f32 to vector<4x128xf32>
    %111 = arith.addf %110, %109 : vector<4x128xf32>
    %112 = arith.divf %110, %111 : vector<4x128xf32>
    %113 = math.tanh %104 : vector<4x128xf32>
    %114 = arith.select %107, %112, %113 : vector<4x128xi1>, vector<4x128xf32>
    %115 = vector.extract_strided_slice %114 {offsets = [0, 0], sizes = [4, 32], strides = [1, 1]} : vector<4x128xf32> to vector<4x32xf32>
    %116 = vector.extract_strided_slice %114 {offsets = [0, 32], sizes = [4, 32], strides = [1, 1]} : vector<4x128xf32> to vector<4x32xf32>
    %117 = vector.extract_strided_slice %114 {offsets = [0, 64], sizes = [4, 32], strides = [1, 1]} : vector<4x128xf32> to vector<4x32xf32>
    %118 = vector.extract_strided_slice %114 {offsets = [0, 96], sizes = [4, 32], strides = [1, 1]} : vector<4x128xf32> to vector<4x32xf32>
    %119 = arith.mulf %116, %102 : vector<4x32xf32>
    %120 = arith.mulf %115, %118 : vector<4x32xf32>
    %121 = arith.addf %119, %120 : vector<4x32xf32>
    %122 = math.tanh %121 : vector<4x32xf32>
    %123 = arith.mulf %117, %122 : vector<4x32xf32>
    %124 = vector.extract_strided_slice %123 {offsets = [0, 0], sizes = [2, 32], strides = [1, 1]} : vector<4x32xf32> to vector<2x32xf32>
    %125 = vector.extract_strided_slice %123 {offsets = [2, 0], sizes = [2, 32], strides = [1, 1]} : vector<4x32xf32> to vector<2x32xf32>
    %126 = vector.extract_strided_slice %121 {offsets = [0, 0], sizes = [2, 32], strides = [1, 1]} : vector<4x32xf32> to vector<2x32xf32>
    %127 = vector.extract_strided_slice %121 {offsets = [2, 0], sizes = [2, 32], strides = [1, 1]} : vector<4x32xf32> to vector<2x32xf32>
    %c4 = arith.constant 4 : index
    %c0_31 = arith.constant 0 : index
    %c0_32 = arith.constant 0 : index
    %128 = vector.load %arg1[%c4, %c0_31, %c0_32] : memref<8x2x4xf32, #tpu.memory_space<vmem>>, vector<1x2x4xf32>
    %129 = vector.shape_cast %128 : vector<1x2x4xf32> to vector<2x4xf32>
    %cst_33 = arith.constant 0.000000e+00 : f32
    %130 = vector.broadcast %cst_33 : f32 to vector<2x64xf32>
    %131 = tpu.concatenate %129, %124, %130 in 1 : vector<2x4xf32>, vector<2x32xf32>, vector<2x64xf32> -> vector<2x100xf32>
    %cst_34 = arith.constant 0.000000e+00 : f32
    %132 = vector.broadcast %cst_34 : f32 to vector<2x36xf32>
    %133 = tpu.concatenate %132, %124, %125 in 1 : vector<2x36xf32>, vector<2x32xf32>, vector<2x32xf32> -> vector<2x100xf32>
    %134 = tpu.concatenate %131, %133 in 0 : vector<2x100xf32>, vector<2x100xf32> -> vector<4x100xf32>
    %135 = tpu.concatenate %126, %127 in 0 : vector<2x32xf32>, vector<2x32xf32> -> vector<4x32xf32>
    %cst_35 = arith.constant dense<0.000000e+00> : vector<4x128xf32>
    %136 = tpu.matmul %134, %0, %cst_35 {dimension_numbers = #tpu.dot_dimension_numbers<[1], [0], [0], [1], [0, 0, 1, 1], [], []>} : vector<4x100xf32>, vector<100x128xf32>, vector<4x128xf32> -> vector<4x128xf32>
    %137 = arith.addf %136, %1 : vector<4x128xf32>
    %138 = tpu.iota {dimensions = array<i32: 1>} : vector<4x128xi32>
    %c96_i32_36 = arith.constant 96 : i32
    %139 = vector.broadcast %c96_i32_36 : i32 to vector<4x128xi32>
    %140 = arith.cmpi slt, %138, %139 : vector<4x128xi32>
    %141 = arith.negf %137 : vector<4x128xf32>
    %142 = math.exp %141 : vector<4x128xf32>
    %cst_37 = arith.constant 1.000000e+00 : f32
    %143 = vector.broadcast %cst_37 : f32 to vector<4x128xf32>
    %144 = arith.addf %143, %142 : vector<4x128xf32>
    %145 = arith.divf %143, %144 : vector<4x128xf32>
    %146 = math.tanh %137 : vector<4x128xf32>
    %147 = arith.select %140, %145, %146 : vector<4x128xi1>, vector<4x128xf32>
    %148 = vector.extract_strided_slice %147 {offsets = [0, 0], sizes = [4, 32], strides = [1, 1]} : vector<4x128xf32> to vector<4x32xf32>
    %149 = vector.extract_strided_slice %147 {offsets = [0, 32], sizes = [4, 32], strides = [1, 1]} : vector<4x128xf32> to vector<4x32xf32>
    %150 = vector.extract_strided_slice %147 {offsets = [0, 64], sizes = [4, 32], strides = [1, 1]} : vector<4x128xf32> to vector<4x32xf32>
    %151 = vector.extract_strided_slice %147 {offsets = [0, 96], sizes = [4, 32], strides = [1, 1]} : vector<4x128xf32> to vector<4x32xf32>
    %152 = arith.mulf %149, %135 : vector<4x32xf32>
    %153 = arith.mulf %148, %151 : vector<4x32xf32>
    %154 = arith.addf %152, %153 : vector<4x32xf32>
    %155 = math.tanh %154 : vector<4x32xf32>
    %156 = arith.mulf %150, %155 : vector<4x32xf32>
    %157 = vector.extract_strided_slice %156 {offsets = [0, 0], sizes = [2, 32], strides = [1, 1]} : vector<4x32xf32> to vector<2x32xf32>
    %158 = vector.extract_strided_slice %156 {offsets = [2, 0], sizes = [2, 32], strides = [1, 1]} : vector<4x32xf32> to vector<2x32xf32>
    %159 = vector.extract_strided_slice %154 {offsets = [0, 0], sizes = [2, 32], strides = [1, 1]} : vector<4x32xf32> to vector<2x32xf32>
    %160 = vector.extract_strided_slice %154 {offsets = [2, 0], sizes = [2, 32], strides = [1, 1]} : vector<4x32xf32> to vector<2x32xf32>
    %c5 = arith.constant 5 : index
    %c0_38 = arith.constant 0 : index
    %c0_39 = arith.constant 0 : index
    %161 = vector.load %arg1[%c5, %c0_38, %c0_39] : memref<8x2x4xf32, #tpu.memory_space<vmem>>, vector<1x2x4xf32>
    %162 = vector.shape_cast %161 : vector<1x2x4xf32> to vector<2x4xf32>
    %cst_40 = arith.constant 0.000000e+00 : f32
    %163 = vector.broadcast %cst_40 : f32 to vector<2x64xf32>
    %164 = tpu.concatenate %162, %157, %163 in 1 : vector<2x4xf32>, vector<2x32xf32>, vector<2x64xf32> -> vector<2x100xf32>
    %cst_41 = arith.constant 0.000000e+00 : f32
    %165 = vector.broadcast %cst_41 : f32 to vector<2x36xf32>
    %166 = tpu.concatenate %165, %157, %158 in 1 : vector<2x36xf32>, vector<2x32xf32>, vector<2x32xf32> -> vector<2x100xf32>
    %167 = tpu.concatenate %164, %166 in 0 : vector<2x100xf32>, vector<2x100xf32> -> vector<4x100xf32>
    %168 = tpu.concatenate %159, %160 in 0 : vector<2x32xf32>, vector<2x32xf32> -> vector<4x32xf32>
    %cst_42 = arith.constant dense<0.000000e+00> : vector<4x128xf32>
    %169 = tpu.matmul %167, %0, %cst_42 {dimension_numbers = #tpu.dot_dimension_numbers<[1], [0], [0], [1], [0, 0, 1, 1], [], []>} : vector<4x100xf32>, vector<100x128xf32>, vector<4x128xf32> -> vector<4x128xf32>
    %170 = arith.addf %169, %1 : vector<4x128xf32>
    %171 = tpu.iota {dimensions = array<i32: 1>} : vector<4x128xi32>
    %c96_i32_43 = arith.constant 96 : i32
    %172 = vector.broadcast %c96_i32_43 : i32 to vector<4x128xi32>
    %173 = arith.cmpi slt, %171, %172 : vector<4x128xi32>
    %174 = arith.negf %170 : vector<4x128xf32>
    %175 = math.exp %174 : vector<4x128xf32>
    %cst_44 = arith.constant 1.000000e+00 : f32
    %176 = vector.broadcast %cst_44 : f32 to vector<4x128xf32>
    %177 = arith.addf %176, %175 : vector<4x128xf32>
    %178 = arith.divf %176, %177 : vector<4x128xf32>
    %179 = math.tanh %170 : vector<4x128xf32>
    %180 = arith.select %173, %178, %179 : vector<4x128xi1>, vector<4x128xf32>
    %181 = vector.extract_strided_slice %180 {offsets = [0, 0], sizes = [4, 32], strides = [1, 1]} : vector<4x128xf32> to vector<4x32xf32>
    %182 = vector.extract_strided_slice %180 {offsets = [0, 32], sizes = [4, 32], strides = [1, 1]} : vector<4x128xf32> to vector<4x32xf32>
    %183 = vector.extract_strided_slice %180 {offsets = [0, 64], sizes = [4, 32], strides = [1, 1]} : vector<4x128xf32> to vector<4x32xf32>
    %184 = vector.extract_strided_slice %180 {offsets = [0, 96], sizes = [4, 32], strides = [1, 1]} : vector<4x128xf32> to vector<4x32xf32>
    %185 = arith.mulf %182, %168 : vector<4x32xf32>
    %186 = arith.mulf %181, %184 : vector<4x32xf32>
    %187 = arith.addf %185, %186 : vector<4x32xf32>
    %188 = math.tanh %187 : vector<4x32xf32>
    %189 = arith.mulf %183, %188 : vector<4x32xf32>
    %190 = vector.extract_strided_slice %189 {offsets = [0, 0], sizes = [2, 32], strides = [1, 1]} : vector<4x32xf32> to vector<2x32xf32>
    %191 = vector.extract_strided_slice %189 {offsets = [2, 0], sizes = [2, 32], strides = [1, 1]} : vector<4x32xf32> to vector<2x32xf32>
    %192 = vector.extract_strided_slice %187 {offsets = [0, 0], sizes = [2, 32], strides = [1, 1]} : vector<4x32xf32> to vector<2x32xf32>
    %193 = vector.extract_strided_slice %187 {offsets = [2, 0], sizes = [2, 32], strides = [1, 1]} : vector<4x32xf32> to vector<2x32xf32>
    %c6 = arith.constant 6 : index
    %c0_45 = arith.constant 0 : index
    %c0_46 = arith.constant 0 : index
    %194 = vector.load %arg1[%c6, %c0_45, %c0_46] : memref<8x2x4xf32, #tpu.memory_space<vmem>>, vector<1x2x4xf32>
    %195 = vector.shape_cast %194 : vector<1x2x4xf32> to vector<2x4xf32>
    %cst_47 = arith.constant 0.000000e+00 : f32
    %196 = vector.broadcast %cst_47 : f32 to vector<2x64xf32>
    %197 = tpu.concatenate %195, %190, %196 in 1 : vector<2x4xf32>, vector<2x32xf32>, vector<2x64xf32> -> vector<2x100xf32>
    %cst_48 = arith.constant 0.000000e+00 : f32
    %198 = vector.broadcast %cst_48 : f32 to vector<2x36xf32>
    %199 = tpu.concatenate %198, %190, %191 in 1 : vector<2x36xf32>, vector<2x32xf32>, vector<2x32xf32> -> vector<2x100xf32>
    %200 = tpu.concatenate %197, %199 in 0 : vector<2x100xf32>, vector<2x100xf32> -> vector<4x100xf32>
    %201 = tpu.concatenate %192, %193 in 0 : vector<2x32xf32>, vector<2x32xf32> -> vector<4x32xf32>
    %cst_49 = arith.constant dense<0.000000e+00> : vector<4x128xf32>
    %202 = tpu.matmul %200, %0, %cst_49 {dimension_numbers = #tpu.dot_dimension_numbers<[1], [0], [0], [1], [0, 0, 1, 1], [], []>} : vector<4x100xf32>, vector<100x128xf32>, vector<4x128xf32> -> vector<4x128xf32>
    %203 = arith.addf %202, %1 : vector<4x128xf32>
    %204 = tpu.iota {dimensions = array<i32: 1>} : vector<4x128xi32>
    %c96_i32_50 = arith.constant 96 : i32
    %205 = vector.broadcast %c96_i32_50 : i32 to vector<4x128xi32>
    %206 = arith.cmpi slt, %204, %205 : vector<4x128xi32>
    %207 = arith.negf %203 : vector<4x128xf32>
    %208 = math.exp %207 : vector<4x128xf32>
    %cst_51 = arith.constant 1.000000e+00 : f32
    %209 = vector.broadcast %cst_51 : f32 to vector<4x128xf32>
    %210 = arith.addf %209, %208 : vector<4x128xf32>
    %211 = arith.divf %209, %210 : vector<4x128xf32>
    %212 = math.tanh %203 : vector<4x128xf32>
    %213 = arith.select %206, %211, %212 : vector<4x128xi1>, vector<4x128xf32>
    %214 = vector.extract_strided_slice %213 {offsets = [0, 0], sizes = [4, 32], strides = [1, 1]} : vector<4x128xf32> to vector<4x32xf32>
    %215 = vector.extract_strided_slice %213 {offsets = [0, 32], sizes = [4, 32], strides = [1, 1]} : vector<4x128xf32> to vector<4x32xf32>
    %216 = vector.extract_strided_slice %213 {offsets = [0, 64], sizes = [4, 32], strides = [1, 1]} : vector<4x128xf32> to vector<4x32xf32>
    %217 = vector.extract_strided_slice %213 {offsets = [0, 96], sizes = [4, 32], strides = [1, 1]} : vector<4x128xf32> to vector<4x32xf32>
    %218 = arith.mulf %215, %201 : vector<4x32xf32>
    %219 = arith.mulf %214, %217 : vector<4x32xf32>
    %220 = arith.addf %218, %219 : vector<4x32xf32>
    %221 = math.tanh %220 : vector<4x32xf32>
    %222 = arith.mulf %216, %221 : vector<4x32xf32>
    %223 = vector.extract_strided_slice %222 {offsets = [0, 0], sizes = [2, 32], strides = [1, 1]} : vector<4x32xf32> to vector<2x32xf32>
    %224 = vector.extract_strided_slice %222 {offsets = [2, 0], sizes = [2, 32], strides = [1, 1]} : vector<4x32xf32> to vector<2x32xf32>
    %225 = vector.extract_strided_slice %220 {offsets = [0, 0], sizes = [2, 32], strides = [1, 1]} : vector<4x32xf32> to vector<2x32xf32>
    %226 = vector.extract_strided_slice %220 {offsets = [2, 0], sizes = [2, 32], strides = [1, 1]} : vector<4x32xf32> to vector<2x32xf32>
    %c7 = arith.constant 7 : index
    %c0_52 = arith.constant 0 : index
    %c0_53 = arith.constant 0 : index
    %227 = vector.load %arg1[%c7, %c0_52, %c0_53] : memref<8x2x4xf32, #tpu.memory_space<vmem>>, vector<1x2x4xf32>
    %228 = vector.shape_cast %227 : vector<1x2x4xf32> to vector<2x4xf32>
    %cst_54 = arith.constant 0.000000e+00 : f32
    %229 = vector.broadcast %cst_54 : f32 to vector<2x64xf32>
    %230 = tpu.concatenate %228, %223, %229 in 1 : vector<2x4xf32>, vector<2x32xf32>, vector<2x64xf32> -> vector<2x100xf32>
    %cst_55 = arith.constant 0.000000e+00 : f32
    %231 = vector.broadcast %cst_55 : f32 to vector<2x36xf32>
    %232 = tpu.concatenate %231, %223, %224 in 1 : vector<2x36xf32>, vector<2x32xf32>, vector<2x32xf32> -> vector<2x100xf32>
    %233 = tpu.concatenate %230, %232 in 0 : vector<2x100xf32>, vector<2x100xf32> -> vector<4x100xf32>
    %234 = tpu.concatenate %225, %226 in 0 : vector<2x32xf32>, vector<2x32xf32> -> vector<4x32xf32>
    %cst_56 = arith.constant dense<0.000000e+00> : vector<4x128xf32>
    %235 = tpu.matmul %233, %0, %cst_56 {dimension_numbers = #tpu.dot_dimension_numbers<[1], [0], [0], [1], [0, 0, 1, 1], [], []>} : vector<4x100xf32>, vector<100x128xf32>, vector<4x128xf32> -> vector<4x128xf32>
    %236 = arith.addf %235, %1 : vector<4x128xf32>
    %237 = tpu.iota {dimensions = array<i32: 1>} : vector<4x128xi32>
    %c96_i32_57 = arith.constant 96 : i32
    %238 = vector.broadcast %c96_i32_57 : i32 to vector<4x128xi32>
    %239 = arith.cmpi slt, %237, %238 : vector<4x128xi32>
    %240 = arith.negf %236 : vector<4x128xf32>
    %241 = math.exp %240 : vector<4x128xf32>
    %cst_58 = arith.constant 1.000000e+00 : f32
    %242 = vector.broadcast %cst_58 : f32 to vector<4x128xf32>
    %243 = arith.addf %242, %241 : vector<4x128xf32>
    %244 = arith.divf %242, %243 : vector<4x128xf32>
    %245 = math.tanh %236 : vector<4x128xf32>
    %246 = arith.select %239, %244, %245 : vector<4x128xi1>, vector<4x128xf32>
    %247 = vector.extract_strided_slice %246 {offsets = [0, 0], sizes = [4, 32], strides = [1, 1]} : vector<4x128xf32> to vector<4x32xf32>
    %248 = vector.extract_strided_slice %246 {offsets = [0, 32], sizes = [4, 32], strides = [1, 1]} : vector<4x128xf32> to vector<4x32xf32>
    %249 = vector.extract_strided_slice %246 {offsets = [0, 64], sizes = [4, 32], strides = [1, 1]} : vector<4x128xf32> to vector<4x32xf32>
    %250 = vector.extract_strided_slice %246 {offsets = [0, 96], sizes = [4, 32], strides = [1, 1]} : vector<4x128xf32> to vector<4x32xf32>
    %251 = arith.mulf %248, %234 : vector<4x32xf32>
    %252 = arith.mulf %247, %250 : vector<4x32xf32>
    %253 = arith.addf %251, %252 : vector<4x32xf32>
    %254 = math.tanh %253 : vector<4x32xf32>
    %255 = arith.mulf %249, %254 : vector<4x32xf32>
    %256 = vector.extract_strided_slice %255 {offsets = [0, 0], sizes = [2, 32], strides = [1, 1]} : vector<4x32xf32> to vector<2x32xf32>
    %257 = vector.extract_strided_slice %255 {offsets = [2, 0], sizes = [2, 32], strides = [1, 1]} : vector<4x32xf32> to vector<2x32xf32>
    %258 = vector.extract_strided_slice %253 {offsets = [2, 0], sizes = [2, 32], strides = [1, 1]} : vector<4x32xf32> to vector<2x32xf32>
    %259 = tpu.concatenate %256, %257 in 1 : vector<2x32xf32>, vector<2x32xf32> -> vector<2x64xf32>
    %c36 = arith.constant 36 : index
    %c0_59 = arith.constant 0 : index
    %260 = vector.load %arg2[%c36, %c0_59] : memref<100x128xf32, #tpu.memory_space<vmem>>, vector<64x128xf32>
    %261 = vector.extract_strided_slice %1 {offsets = [2, 0], sizes = [2, 128], strides = [1, 1]} : vector<4x128xf32> to vector<2x128xf32>
    %cst_60 = arith.constant dense<0.000000e+00> : vector<2x128xf32>
    %262 = tpu.matmul %259, %260, %cst_60 {dimension_numbers = #tpu.dot_dimension_numbers<[1], [0], [0], [1], [0, 0, 1, 1], [], []>} : vector<2x64xf32>, vector<64x128xf32>, vector<2x128xf32> -> vector<2x128xf32>
    %263 = arith.addf %262, %261 : vector<2x128xf32>
    %264 = tpu.iota {dimensions = array<i32: 1>} : vector<2x128xi32>
    %c96_i32_61 = arith.constant 96 : i32
    %265 = vector.broadcast %c96_i32_61 : i32 to vector<2x128xi32>
    %266 = arith.cmpi slt, %264, %265 : vector<2x128xi32>
    %267 = arith.negf %263 : vector<2x128xf32>
    %268 = math.exp %267 : vector<2x128xf32>
    %cst_62 = arith.constant 1.000000e+00 : f32
    %269 = vector.broadcast %cst_62 : f32 to vector<2x128xf32>
    %270 = arith.addf %269, %268 : vector<2x128xf32>
    %271 = arith.divf %269, %270 : vector<2x128xf32>
    %272 = math.tanh %263 : vector<2x128xf32>
    %273 = arith.select %266, %271, %272 : vector<2x128xi1>, vector<2x128xf32>
    %274 = vector.extract_strided_slice %273 {offsets = [0, 0], sizes = [2, 32], strides = [1, 1]} : vector<2x128xf32> to vector<2x32xf32>
    %275 = vector.extract_strided_slice %273 {offsets = [0, 32], sizes = [2, 32], strides = [1, 1]} : vector<2x128xf32> to vector<2x32xf32>
    %276 = vector.extract_strided_slice %273 {offsets = [0, 64], sizes = [2, 32], strides = [1, 1]} : vector<2x128xf32> to vector<2x32xf32>
    %277 = vector.extract_strided_slice %273 {offsets = [0, 96], sizes = [2, 32], strides = [1, 1]} : vector<2x128xf32> to vector<2x32xf32>
    %278 = arith.mulf %275, %258 : vector<2x32xf32>
    %279 = arith.mulf %274, %277 : vector<2x32xf32>
    %280 = arith.addf %278, %279 : vector<2x32xf32>
    %281 = math.tanh %280 : vector<2x32xf32>
    %282 = arith.mulf %276, %281 : vector<2x32xf32>
    %283 = tpu.concatenate %59, %92, %125, %158, %191, %224, %257, %282 in 0 : vector<2x32xf32>, vector<2x32xf32>, vector<2x32xf32>, vector<2x32xf32>, vector<2x32xf32>, vector<2x32xf32>, vector<2x32xf32>, vector<2x32xf32> -> vector<16x32xf32>
    %c0_63 = arith.constant 0 : index
    %c0_64 = arith.constant 0 : index
    %284 = vector.load %arg4[%c0_63, %c0_64] : memref<32x4xf32, #tpu.memory_space<vmem>>, vector<32x4xf32>
    %cst_65 = arith.constant dense<0.000000e+00> : vector<16x4xf32>
    %285 = tpu.matmul %283, %284, %cst_65 {dimension_numbers = #tpu.dot_dimension_numbers<[1], [0], [0], [1], [0, 0, 1, 1], [], []>} : vector<16x32xf32>, vector<32x4xf32>, vector<16x4xf32> -> vector<16x4xf32>
    %c0_66 = arith.constant 0 : index
    %c0_67 = arith.constant 0 : index
    %286 = vector.load %arg5[%c0_66, %c0_67] : memref<1x4xf32, #tpu.memory_space<vmem>>, vector<1x4xf32>
    %287 = vector.broadcast %286 : vector<1x4xf32> to vector<16x4xf32>
    %288 = arith.addf %285, %287 : vector<16x4xf32>
    %cst_68 = arith.constant 0.000000e+00 : f32
    %289 = vector.broadcast %cst_68 : f32 to vector<16x4xf32>
    %290 = arith.maximumf %288, %289 : vector<16x4xf32>
    %c0_69 = arith.constant 0 : index
    %c0_70 = arith.constant 0 : index
    %291 = vector.load %arg6[%c0_69, %c0_70] : memref<8x16xf32, #tpu.memory_space<vmem>>, vector<8x16xf32>
    %cst_71 = arith.constant dense<0.000000e+00> : vector<8x4xf32>
    %292 = tpu.matmul %291, %290, %cst_71 {dimension_numbers = #tpu.dot_dimension_numbers<[1], [0], [0], [1], [0, 0, 1, 1], [], []>} : vector<8x16xf32>, vector<16x4xf32>, vector<8x4xf32> -> vector<8x4xf32>
    %c0_72 = arith.constant 0 : index
    %c0_73 = arith.constant 0 : index
    %293 = vector.load %arg7[%c0_72, %c0_73] : memref<8x1xf32, #tpu.memory_space<vmem>>, vector<8x1xf32>
    %294 = vector.broadcast %293 : vector<8x1xf32> to vector<8x4xf32>
    %295 = arith.addf %292, %294 : vector<8x4xf32>
    %c0_74 = arith.constant 0 : index
    %c0_75 = arith.constant 0 : index
    %296 = vector.load %arg8[%c0_74, %c0_75] : memref<8x4xf32, #tpu.memory_space<vmem>>, vector<8x4xf32>
    tpu.vector_store %arg8[%c0_74, %c0_75], %295 {strides = array<i32>} : memref<8x4xf32, #tpu.memory_space<vmem>>, vector<8x4xf32>,
    return
  }
  func.func @transform_0(%arg0: i32) -> (i32, i32, i32) {
    %c0_i32 = arith.constant 0 : i32
    %c0_i32_0 = arith.constant 0 : i32
    %c0_i32_1 = arith.constant 0 : i32
    %c0_i32_2 = arith.constant 0 : i32
    return %c0_i32, %c0_i32_0, %c0_i32_1 : i32, i32, i32
  }
  func.func @transform_1(%arg0: i32) -> (i32, i32) {
    %c0_i32 = arith.constant 0 : i32
    %c0_i32_0 = arith.constant 0 : i32
    %c0_i32_1 = arith.constant 0 : i32
    return %c0_i32, %c0_i32_0 : i32, i32
  }
  func.func @transform_2(%arg0: i32) -> (i32, i32) {
    %c0_i32 = arith.constant 0 : i32
    %c0_i32_0 = arith.constant 0 : i32
    %c0_i32_1 = arith.constant 0 : i32
    return %c0_i32, %c0_i32_0 : i32, i32
  }
  func.func @transform_3(%arg0: i32) -> (i32, i32) {
    %c0_i32 = arith.constant 0 : i32
    %c0_i32_0 = arith.constant 0 : i32
    %c0_i32_1 = arith.constant 0 : i32
    return %c0_i32, %c0_i32_0 : i32, i32
  }
  func.func @transform_4(%arg0: i32) -> (i32, i32) {
    %c0_i32 = arith.constant 0 : i32
    %c0_i32_0 = arith.constant 0 : i32
    %c0_i32_1 = arith.constant 0 : i32
    return %c0_i32, %c0_i32_0 : i32, i32
  }
  func.func @transform_5(%arg0: i32) -> (i32, i32) {
    %c0_i32 = arith.constant 0 : i32
    %c0_i32_0 = arith.constant 0 : i32
    %c0_i32_1 = arith.constant 0 : i32
    return %c0_i32, %c0_i32_0 : i32, i32
  }
  func.func @transform_6(%arg0: i32) -> (i32, i32) {
    %c0_i32 = arith.constant 0 : i32
    %c0_i32_0 = arith.constant 0 : i32
    %c0_i32_1 = arith.constant 0 : i32
    return %c0_i32, %c0_i32_0 : i32, i32
  }
  func.func @transform_7(%arg0: i32) -> (i32, i32) {
    %c0_i32 = arith.constant 0 : i32
    %c0_i32_0 = arith.constant 0 : i32
    %c0_i32_1 = arith.constant 0 : i32
    return %c0_i32, %c0_i32_0 : i32, i32
  }
}

</mosaic_0001>

<llo_original>
// kernel: tpu_custom_call.1
$region0: #{tpu_custom_call.1}
  #allocation0 [shape = 'u32[]', space=smem, size = 0x4, offset = 0x4, fixed_abs, tag = 'smem constant byte address 0x4 - core index']
  #allocation1 [shape = 'u32[144,128]{1,0:T(1,128)}', space=vmem, size = 0x12000, scoped, tag = 'internal scratch']
  %s0 = inlined_call_operand.vmem [shape: f32[8,2,4], index: 0, kind: input, shape index: {}]
  %s1 = inlined_call_operand.hbm [shape: f32[100,128], index: 1, kind: input, shape index: {}]
  %s2 = inlined_call_operand.vmem [shape: f32[4,128], index: 2, kind: input, shape index: {}]
  %s3 = inlined_call_operand.vmem [shape: f32[32,4], index: 3, kind: input, shape index: {}]
  %s4 = inlined_call_operand.vmem [shape: f32[1,4], index: 4, kind: input, shape index: {}]
  %s5 = inlined_call_operand.vmem [shape: f32[8,16], index: 5, kind: input, shape index: {}]
  %s6 = inlined_call_operand.vmem [shape: f32[8,1], index: 6, kind: input, shape index: {}]
  %s7 = inlined_call_operand.vmem [shape: f32[8,4], index: 7, kind: output, shape index: {}]
  %s8 = sld [smem:[#allocation0]]
  $region42: #{tpu_custom_call.1} parent=0
    _
  %s10 = ssub.s32 1, %s8
  %s11 = scalar_select 0, %s10, %s8
  $region1: #{tpu_custom_call.1} parent=0
    #allocation2 [shape = 'u8[53248]{0}', space=vmem, size = 0xd000, scoped, tag = 'input window, operand 1, single buffered']
    #allocation3 [shape = 's32[1]{0}', space=sflag, size = 0x4, scoped, tag = 'scoped memory for tpu_custom_call.1']
    %12 = vsyncpa [#allocation3], 0
    // Predicated region
    $region2: #{tpu_custom_call.1} parent=1 // pred_check
      _
    $region3: #{tpu_custom_call.1} parent=1 // pred_check_branch
      %14 = sbr.rel (0) target = $region5
    $region4: #{tpu_custom_call.1} parent=1 // pred_region
      _
    $region5: #{tpu_custom_call.1} parent=1 // pred_fallthru
      _
    // Predicated region
    $region6: #{tpu_custom_call.1} parent=1 // pred_check
      _
    $region7: #{tpu_custom_call.1} parent=1 // pred_check_branch
      %16 = sbr.rel (0) target = $region9
    $region8: #{tpu_custom_call.1} parent=1 // pred_region
      %s18 = ssub.s32 1664, 1664
      %19 = vsyncadd [#allocation3], %s18
      %s20 = sshll.u32 [#allocation2], 4
      %s21 = int_to_ptr.vmem [resolvable:$true] %s20
      %26 = dma.hbm_to_vmem [thread:$0]  %s1, 1664, %s21, [#allocation3], 128, 128, 8
    $region9: #{tpu_custom_call.1} parent=1 // pred_fallthru
      _
    // Predicated region
    $region10: #{tpu_custom_call.1} parent=1 // pred_check
      _
    $region11: #{tpu_custom_call.1} parent=1 // pred_check_branch
      %28 = sbr.rel (0) target = $region13
    $region12: #{tpu_custom_call.1} parent=1 // pred_region
      _
    $region13: #{tpu_custom_call.1} parent=1 // pred_fallthru
      _
    // Predicated region
    $region14: #{tpu_custom_call.1} parent=1 // pred_check
      _
    $region15: #{tpu_custom_call.1} parent=1 // pred_check_branch
      %30 = sbr.rel (0) target = $region17
    $region16: #{tpu_custom_call.1} parent=1 // pred_region
      _
    $region17: #{tpu_custom_call.1} parent=1 // pred_fallthru
      _
    // Predicated region
    $region18: #{tpu_custom_call.1} parent=1 // pred_check
      _
    $region19: #{tpu_custom_call.1} parent=1 // pred_check_branch
      %32 = sbr.rel (0) target = $region21
    $region20: #{tpu_custom_call.1} parent=1 // pred_region
      _
    $region21: #{tpu_custom_call.1} parent=1 // pred_fallthru
      _
    // Predicated region
    $region22: #{tpu_custom_call.1} parent=1 // pred_check
      _
    $region23: #{tpu_custom_call.1} parent=1 // pred_check_branch
      %34 = sbr.rel (0) target = $region25
    $region24: #{tpu_custom_call.1} parent=1 // pred_region
      _
    $region25: #{tpu_custom_call.1} parent=1 // pred_fallthru
      _
    // Predicated region
    $region26: #{tpu_custom_call.1} parent=1 // pred_check
      _
    $region27: #{tpu_custom_call.1} parent=1 // pred_check_branch
      %36 = sbr.rel (0) target = $region29
    $region28: #{tpu_custom_call.1} parent=1 // pred_region
      _
    $region29: #{tpu_custom_call.1} parent=1 // pred_fallthru
      _
    // Predicated region
    $region30: #{tpu_custom_call.1} parent=1 // pred_check
      _
    $region31: #{tpu_custom_call.1} parent=1 // pred_check_branch
      %38 = sbr.rel (0) target = $region33
    $region32: #{tpu_custom_call.1} parent=1 // pred_region
      %39 = dma.done [#allocation3], 1664
    $region33: #{tpu_custom_call.1} parent=1 // pred_fallthru
      _
    %v40 = vld [vmem:[#allocation2] sm:$0xff]
    %v41 = vld [vmem:[#allocation2 + $0x8] sm:$0xff]
    %v42 = vld [vmem:[#allocation2 + $0x10] sm:$0xff]
    %v43 = vld [vmem:[#allocation2 + $0x18] sm:$0xff]
    %v44 = vld [vmem:[#allocation2 + $0x20] sm:$0xff]
    %v45 = vld [vmem:[#allocation2 + $0x28] sm:$0xff]
    %v46 = vld [vmem:[#allocation2 + $0x30] sm:$0xff]
    %v47 = vld [vmem:[#allocation2 + $0x38] sm:$0xff]
    %v48 = vld [vmem:[#allocation2 + $0x40] sm:$0xff]
    %v49 = vld [vmem:[#allocation2 + $0x48] sm:$0xff]
    %v50 = vld [vmem:[#allocation2 + $0x50] sm:$0xff]
    %v51 = vld [vmem:[#allocation2 + $0x58] sm:$0xff]
    %v52 = vld [vmem:[#allocation2 + $0x60] sm:$0xf]
    %v53 = vld [vmem:[%s2] sm:$0xf]
    %v54 = vld [vmem:[%s0] sm:$0x3]
    %vm55 = vcmask 31744
    %v56 = vsel %vm55, %v54, 0.0
    %v57 = vld [vmem:[#allocation2] sm:$0xff]
    %v58 = vld [vmem:[#allocation2 + $0x8] sm:$0xff]
    %v59 = vld [vmem:[#allocation2 + $0x10] sm:$0xff]
    %v60 = vld [vmem:[#allocation2 + $0x18] sm:$0xff]
    %v61 = vld [vmem:[#allocation2 + $0x20] sm:$0xf]
    %vm62 = vcmask 293888
    %v64 = vsel %vm62, %v56, 0
    %vm66 = vcmask 1043456
    %v68 = vsel %vm66, %v61, 0
    %70 = vmatprep.subr.mxu0 0.0
    %71 = vmatpush1.msra.mxu0 %v57
    %72 = vmatprep.subr.mxu0 0.0
    %73 = vmatpush1.msra.mxu0 %v58
    %74 = vmatprep.subr.mxu0 0.0
    %75 = vmatpush1.msra.mxu0 %v59
    %76 = vmatprep.subr.mxu0 0.0
    %77 = vmatpush1.msra.mxu0 %v60
    %78 = vmatprep.subr.mxu0 0.0
    %79 = vmatpush1.msra.mxu0 %v68
    %80 = vmatprep.subr.mxu0 0.0
    %81 = vmatpush1.msra.mxu0 0.0
    %82 = vmatprep.subr.mxu0 0.0
    %83 = vmatpush1.msra.mxu0 0.0
    %84 = vmatprep.subr.mxu0 0.0
    %85 = vmatpush1.msra.mxu0 0.0
    %86 = vmatprep.subr.mxu0 0.0
    %87 = vmatpush1.msra.mxu0 0.0
    %88 = vmatprep.subr.mxu0 0.0
    %89 = vmatpush1.msra.mxu0 0.0
    %90 = vmatprep.subr.mxu0 0.0
    %91 = vmatpush1.msra.mxu0 0.0
    %92 = vmatprep.subr.mxu0 0.0
    %93 = vmatpush1.msra.mxu0 0.0
    %94 = vmatprep.subr.mxu0 0.0
    %95 = vmatpush1.msra.mxu0 0.0
    %96 = vmatprep.subr.mxu0 0.0
    %97 = vmatpush1.msra.mxu0 0.0
    %98 = vmatprep.subr.mxu0 0.0
    %99 = vmatpush1.msra.mxu0 0.0
    %100 = vmatprep.subr.mxu0 0.0
    %101 = vmatpush1.msra.mxu0 0.0
    %102 = vmatprep.subr.mxu0 0.0
    %103 = vmatpush1.msra.mxu0 0.0
    %104 = vmatprep.subr.mxu0 0.0
    %105 = vmatpush1.msra.mxu0 0.0
    %106 = vmatprep.subr.mxu0 0.0
    %107 = vmatpush1.msra.mxu0 0.0
    %108 = vmatprep.subr.mxu0 0.0
    %109 = vmatpush1.msra.mxu0 0.0
    %110 = vmatprep.subr.mxu0 0.0
    %111 = vmatpush1.msra.mxu0 0.0
    %112 = vmatprep.subr.mxu0 0.0
    %113 = vmatpush1.msra.mxu0 0.0
    %114 = vmatprep.subr.mxu0 0.0
    %115 = vmatpush1.msra.mxu0 0.0
    %116 = vmatprep.subr.mxu0 0.0
    %117 = vmatpush1.msra.mxu0 0.0
    %118 = vmatprep.subr.mxu0 0.0
    %119 = vmatpush1.msra.mxu0 0.0
    %120 = vmatprep.subr.mxu0 0.0
    %121 = vmatpush1.msra.mxu0 0.0
    %122 = vmatprep.subr.mxu0 0.0
    %123 = vmatpush1.msra.mxu0 0.0
    %124 = vmatprep.subr.mxu0 0.0
    %125 = vmatpush1.msra.mxu0 0.0
    %126 = vmatprep.subr.mxu0 0.0
    %127 = vmatpush1.msra.mxu0 0.0
    %128 = vmatprep.subr.mxu0 0.0
    %129 = vmatpush1.msra.mxu0 0.0
    %130 = vmatprep.subr.mxu0 0.0
    %131 = vmatpush1.msra.mxu0 0.0
    %132 = vmatprep.subr.mxu0 0.0
    %133 = vmatpush1.msra.mxu0 0.0
    %134 = vmatprep.mubr.f32.mxu0 0.0
    %135 = vmatmul.mubr.f32.gmra.mrb[0].mxu0 %v64
    %v136 = vpop.f32.mrb[0].mxu0
    %v137 = vadd.f32 %v53, %v136
    %v138 = vpop.f32.mrb[0].mxu0
    %139 = vdwg.mxu0
    %v140 = vlaneseq
    %v141 = vand.u32 %v140, 127
    %vm142 = vcmp.lt.s32.totalorder %v141, 96
    %v143 = vxor.u32 %v137, 2147483648
    %v144 = vmul.f32 %v143, 1.442695
    %v145 = vpow.pop %v144
    %v146 = vadd.f32 %v145, 1.0
    %v147 = vrcp.pop %v146
    %v148 = vmul.f32 1.0, %v147
    %v149 = vtanh.pop %v137
    %v150 = vsel %vm142, %v148, %v149
    %v151 = vmul.f32 %v150, 0.0
    %153 = vrot.lane.b32.xlu0 %v150, 32
    %v154 = vpop.permute.xlu0 %153
    %v156 = vmul.f32 %v150, %v154
    %158 = vrot.lane.b32.xlu0 %v156, 32
    %v159 = vpop.permute.xlu0 %158
    %v161 = vadd.f32 %v151, %v159
    %v162 = vtanh.pop %v161
    %164 = vrot.lane.b32.xlu0 %v162, 32
    %v165 = vpop.permute.xlu0 %164
    %v167 = vmul.f32 %v150, %v165
    %s168 = scalar_lea.vmem %s0, 2
    %v169 = vld [vmem:[%s168] sm:$0x3]
    %171 = vrot.lane.b32.xlu0 %v167, 68
    %v172 = vpop.permute.xlu0 %171
    %v174 = vsel %vm55, %v169, %v172
    %v175 = vsel %vm62, %v174, 0.0
    %176 = vrot.lane.b32.xlu0 %v167, 100
    %v177 = vpop.permute.xlu0 %176
    %v179 = vsel %vm62, 0.0, %v177
    %vm180 = vcmask 556032
    %v181 = vsel %vm180, %v179, 0.0
    %v183 = vrot.slane %v181, 6
    %vm185 = vcmask 1041408
    %v186 = vsel %vm185, %v175, %v183
    %v187 = vsel %vm185, %v161, 0.0
    %vm188 = vcmask 818176
    %v190 = vsel %vm188, %v186, 0
    %v193 = vsel %vm66, %v52, 0
    %195 = vmatprep.subr.mxu0 0.0
    %196 = vmatpush1.msra.mxu0 %v40
    %197 = vmatprep.subr.mxu0 0.0
    %198 = vmatpush1.msra.mxu0 %v41
    %199 = vmatprep.subr.mxu0 0.0
    %200 = vmatpush1.msra.mxu0 %v42
    %201 = vmatprep.subr.mxu0 0.0
    %202 = vmatpush1.msra.mxu0 %v43
    %203 = vmatprep.subr.mxu0 0.0
    %204 = vmatpush1.msra.mxu0 %v44
    %205 = vmatprep.subr.mxu0 0.0
    %206 = vmatpush1.msra.mxu0 %v45
    %207 = vmatprep.subr.mxu0 0.0
    %208 = vmatpush1.msra.mxu0 %v46
    %209 = vmatprep.subr.mxu0 0.0
    %210 = vmatpush1.msra.mxu0 %v47
    %211 = vmatprep.subr.mxu0 0.0
    %212 = vmatpush1.msra.mxu0 %v48
    %213 = vmatprep.subr.mxu0 0.0
    %214 = vmatpush1.msra.mxu0 %v49
    %215 = vmatprep.subr.mxu0 0.0
    %216 = vmatpush1.msra.mxu0 %v50
    %217 = vmatprep.subr.mxu0 0.0
    %218 = vmatpush1.msra.mxu0 %v51
    %219 = vmatprep.subr.mxu0 0.0
    %220 = vmatpush1.msra.mxu0 %v193
    %221 = vmatprep.subr.mxu0 0.0
    %222 = vmatpush1.msra.mxu0 0.0
    %223 = vmatprep.subr.mxu0 0.0
    %224 = vmatpush1.msra.mxu0 0.0
    %225 = vmatprep.subr.mxu0 0.0
    %226 = vmatpush1.msra.mxu0 0.0
    %227 = vmatprep.subr.mxu0 0.0
    %228 = vmatpush1.msra.mxu0 0.0
    %229 = vmatprep.subr.mxu0 0.0
    %230 = vmatpush1.msra.mxu0 0.0
    %231 = vmatprep.subr.mxu0 0.0
    %232 = vmatpush1.msra.mxu0 0.0
    %233 = vmatprep.subr.mxu0 0.0
    %234 = vmatpush1.msra.mxu0 0.0
    %235 = vmatprep.subr.mxu0 0.0
    %236 = vmatpush1.msra.mxu0 0.0
    %237 = vmatprep.subr.mxu0 0.0
    %238 = vmatpush1.msra.mxu0 0.0
    %239 = vmatprep.subr.mxu0 0.0
    %240 = vmatpush1.msra.mxu0 0.0
    %241 = vmatprep.subr.mxu0 0.0
    %242 = vmatpush1.msra.mxu0 0.0
    %243 = vmatprep.subr.mxu0 0.0
    %244 = vmatpush1.msra.mxu0 0.0
    %245 = vmatprep.subr.mxu0 0.0
    %246 = vmatpush1.msra.mxu0 0.0
    %247 = vmatprep.subr.mxu0 0.0
    %248 = vmatpush1.msra.mxu0 0.0
    %249 = vmatprep.subr.mxu0 0.0
    %250 = vmatpush1.msra.mxu0 0.0
    %251 = vmatprep.subr.mxu0 0.0
    %252 = vmatpush1.msra.mxu0 0.0
    %253 = vmatprep.subr.mxu0 0.0
    %254 = vmatpush1.msra.mxu0 0.0
    %255 = vmatprep.subr.mxu0 0.0
    %256 = vmatpush1.msra.mxu0 0.0
    %257 = vmatprep.subr.mxu0 0.0
    %258 = vmatpush1.msra.mxu0 0.0
    %259 = vmatprep.mubr.f32.mxu0 0.0
    %260 = vmatmul.mubr.f32.gmra.mrb[0].mxu0 %v190
    %v261 = vpop.f32.mrb[0].mxu0
    %v262 = vadd.f32 %v53, %v261
    %v263 = vpop.f32.mrb[0].mxu0
    %264 = vdwg.mxu0
    %v265 = vxor.u32 %v262, 2147483648
    %v266 = vmul.f32 %v265, 1.442695
    %v267 = vpow.pop %v266
    %v268 = vadd.f32 %v267, 1.0
    %v269 = vrcp.pop %v268
    %v270 = vmul.f32 1.0, %v269
    %v271 = vtanh.pop %v262
    %v272 = vsel %vm142, %v270, %v271
    %v273 = vmul.f32 %v272, %v187
    %275 = vrot.lane.b32.xlu0 %v272, 32
    %v276 = vpop.permute.xlu0 %275
    %v278 = vmul.f32 %v272, %v276
    %280 = vrot.lane.b32.xlu0 %v278, 32
    %v281 = vpop.permute.xlu0 %280
    %v283 = vadd.f32 %v273, %v281
    %v284 = vtanh.pop %v283
    %286 = vrot.lane.b32.xlu0 %v284, 32
    %v287 = vpop.permute.xlu0 %286
    %v289 = vmul.f32 %v272, %v287
    %s290 = scalar_lea.vmem %s0, 4
    %v291 = vld [vmem:[%s290] sm:$0x3]
    %293 = vrot.lane.b32.xlu0 %v289, 68
    %v294 = vpop.permute.xlu0 %293
    %v296 = vsel %vm55, %v291, %v294
    %v297 = vsel %vm62, %v296, 0.0
    %298 = vrot.lane.b32.xlu0 %v289, 100
    %v299 = vpop.permute.xlu0 %298
    %v301 = vrot.slane %v289, 2
    %302 = vrot.lane.b32.xlu0 %v301, 4
    %v303 = vpop.permute.xlu0 %302
    %v305 = vsel %vm62, 0.0, %v299
    %v306 = vsel %vm180, %v305, %v303
    %v308 = vrot.slane %v306, 6
    %v310 = vsel %vm185, %v297, %v308
    %v312 = vsel %vm188, %v310, 0
    %314 = vmatprep.subr.mxu0 0.0
    %315 = vmatpush1.msra.mxu0 %v40
    %316 = vmatprep.subr.mxu0 0.0
    %317 = vmatpush1.msra.mxu0 %v41
    %318 = vmatprep.subr.mxu0 0.0
    %319 = vmatpush1.msra.mxu0 %v42
    %320 = vmatprep.subr.mxu0 0.0
    %321 = vmatpush1.msra.mxu0 %v43
    %322 = vmatprep.subr.mxu0 0.0
    %323 = vmatpush1.msra.mxu0 %v44
    %324 = vmatprep.subr.mxu0 0.0
    %325 = vmatpush1.msra.mxu0 %v45
    %326 = vmatprep.subr.mxu0 0.0
    %327 = vmatpush1.msra.mxu0 %v46
    %328 = vmatprep.subr.mxu0 0.0
    %329 = vmatpush1.msra.mxu0 %v47
    %330 = vmatprep.subr.mxu0 0.0
    %331 = vmatpush1.msra.mxu0 %v48
    %332 = vmatprep.subr.mxu0 0.0
    %333 = vmatpush1.msra.mxu0 %v49
    %334 = vmatprep.subr.mxu0 0.0
    %335 = vmatpush1.msra.mxu0 %v50
    %336 = vmatprep.subr.mxu0 0.0
    %337 = vmatpush1.msra.mxu0 %v51
    %338 = vmatprep.subr.mxu0 0.0
    %339 = vmatpush1.msra.mxu0 %v193
    %340 = vmatprep.subr.mxu0 0.0
    %341 = vmatpush1.msra.mxu0 0.0
    %342 = vmatprep.subr.mxu0 0.0
    %343 = vmatpush1.msra.mxu0 0.0
    %344 = vmatprep.subr.mxu0 0.0
    %345 = vmatpush1.msra.mxu0 0.0
    %346 = vmatprep.subr.mxu0 0.0
    %347 = vmatpush1.msra.mxu0 0.0
    %348 = vmatprep.subr.mxu0 0.0
    %349 = vmatpush1.msra.mxu0 0.0
    %350 = vmatprep.subr.mxu0 0.0
    %351 = vmatpush1.msra.mxu0 0.0
    %352 = vmatprep.subr.mxu0 0.0
    %353 = vmatpush1.msra.mxu0 0.0
    %354 = vmatprep.subr.mxu0 0.0
    %355 = vmatpush1.msra.mxu0 0.0
    %356 = vmatprep.subr.mxu0 0.0
    %357 = vmatpush1.msra.mxu0 0.0
    %358 = vmatprep.subr.mxu0 0.0
    %359 = vmatpush1.msra.mxu0 0.0
    %360 = vmatprep.subr.mxu0 0.0
    %361 = vmatpush1.msra.mxu0 0.0
    %362 = vmatprep.subr.mxu0 0.0
    %363 = vmatpush1.msra.mxu0 0.0
    %364 = vmatprep.subr.mxu0 0.0
    %365 = vmatpush1.msra.mxu0 0.0
    %366 = vmatprep.subr.mxu0 0.0
    %367 = vmatpush1.msra.mxu0 0.0
    %368 = vmatprep.subr.mxu0 0.0
    %369 = vmatpush1.msra.mxu0 0.0
    %370 = vmatprep.subr.mxu0 0.0
    %371 = vmatpush1.msra.mxu0 0.0
    %372 = vmatprep.subr.mxu0 0.0
    %373 = vmatpush1.msra.mxu0 0.0
    %374 = vmatprep.subr.mxu0 0.0
    %375 = vmatpush1.msra.mxu0 0.0
    %376 = vmatprep.subr.mxu0 0.0
    %377 = vmatpush1.msra.mxu0 0.0
    %378 = vmatprep.mubr.f32.mxu0 0.0
    %379 = vmatmul.mubr.f32.gmra.mrb[0].mxu0 %v312
    %v380 = vpop.f32.mrb[0].mxu0
    %v381 = vadd.f32 %v53, %v380
    %v382 = vpop.f32.mrb[0].mxu0
    %383 = vdwg.mxu0
    %v384 = vxor.u32 %v381, 2147483648
    %v385 = vmul.f32 %v384, 1.442695
    %v386 = vpow.pop %v385
    %v387 = vadd.f32 %v386, 1.0
    %v388 = vrcp.pop %v387
    %v389 = vmul.f32 1.0, %v388
    %v390 = vtanh.pop %v381
    %v391 = vsel %vm142, %v389, %v390
    %v392 = vmul.f32 %v391, %v283
    %394 = vrot.lane.b32.xlu0 %v391, 32
    %v395 = vpop.permute.xlu0 %394
    %v397 = vmul.f32 %v391, %v395
    %399 = vrot.lane.b32.xlu0 %v397, 32
    %v400 = vpop.permute.xlu0 %399
    %v402 = vadd.f32 %v392, %v400
    %v403 = vtanh.pop %v402
    %405 = vrot.lane.b32.xlu0 %v403, 32
    %v406 = vpop.permute.xlu0 %405
    %v408 = vmul.f32 %v391, %v406
    %s409 = scalar_lea.vmem %s0, 6
    %v410 = vld [vmem:[%s409] sm:$0x3]
    %412 = vrot.lane.b32.xlu0 %v408, 68
    %v413 = vpop.permute.xlu0 %412
    %v415 = vsel %vm55, %v410, %v413
    %v416 = vsel %vm62, %v415, 0.0
    %417 = vrot.lane.b32.xlu0 %v408, 100
    %v418 = vpop.permute.xlu0 %417
    %v420 = vrot.slane %v408, 2
    %421 = vrot.lane.b32.xlu0 %v420, 4
    %v422 = vpop.permute.xlu0 %421
    %v424 = vsel %vm62, 0.0, %v418
    %v425 = vsel %vm180, %v424, %v422
    %v427 = vrot.slane %v425, 6
    %v429 = vsel %vm185, %v416, %v427
    %v431 = vsel %vm188, %v429, 0
    %433 = vmatprep.subr.mxu0 0.0
    %434 = vmatpush1.msra.mxu0 %v40
    %435 = vmatprep.subr.mxu0 0.0
    %436 = vmatpush1.msra.mxu0 %v41
    %437 = vmatprep.subr.mxu0 0.0
    %438 = vmatpush1.msra.mxu0 %v42
    %439 = vmatprep.subr.mxu0 0.0
    %440 = vmatpush1.msra.mxu0 %v43
    %441 = vmatprep.subr.mxu0 0.0
    %442 = vmatpush1.msra.mxu0 %v44
    %443 = vmatprep.subr.mxu0 0.0
    %444 = vmatpush1.msra.mxu0 %v45
    %445 = vmatprep.subr.mxu0 0.0
    %446 = vmatpush1.msra.mxu0 %v46
    %447 = vmatprep.subr.mxu0 0.0
    %448 = vmatpush1.msra.mxu0 %v47
    %449 = vmatprep.subr.mxu0 0.0
    %450 = vmatpush1.msra.mxu0 %v48
    %451 = vmatprep.subr.mxu0 0.0
    %452 = vmatpush1.msra.mxu0 %v49
    %453 = vmatprep.subr.mxu0 0.0
    %454 = vmatpush1.msra.mxu0 %v50
    %455 = vmatprep.subr.mxu0 0.0
    %456 = vmatpush1.msra.mxu0 %v51
    %457 = vmatprep.subr.mxu0 0.0
    %458 = vmatpush1.msra.mxu0 %v193
    %459 = vmatprep.subr.mxu0 0.0
    %460 = vmatpush1.msra.mxu0 0.0
    %461 = vmatprep.subr.mxu0 0.0
    %462 = vmatpush1.msra.mxu0 0.0
    %463 = vmatprep.subr.mxu0 0.0
    %464 = vmatpush1.msra.mxu0 0.0
    %465 = vmatprep.subr.mxu0 0.0
    %466 = vmatpush1.msra.mxu0 0.0
    %467 = vmatprep.subr.mxu0 0.0
    %468 = vmatpush1.msra.mxu0 0.0
    %469 = vmatprep.subr.mxu0 0.0
    %470 = vmatpush1.msra.mxu0 0.0
    %471 = vmatprep.subr.mxu0 0.0
    %472 = vmatpush1.msra.mxu0 0.0
    %473 = vmatprep.subr.mxu0 0.0
    %474 = vmatpush1.msra.mxu0 0.0
    %475 = vmatprep.subr.mxu0 0.0
    %476 = vmatpush1.msra.mxu0 0.0
    %477 = vmatprep.subr.mxu0 0.0
    %478 = vmatpush1.msra.mxu0 0.0
    %479 = vmatprep.subr.mxu0 0.0
    %480 = vmatpush1.msra.mxu0 0.0
    %481 = vmatprep.subr.mxu0 0.0
    %482 = vmatpush1.msra.mxu0 0.0
    %483 = vmatprep.subr.mxu0 0.0
    %484 = vmatpush1.msra.mxu0 0.0
    %485 = vmatprep.subr.mxu0 0.0
    %486 = vmatpush1.msra.mxu0 0.0
    %487 = vmatprep.subr.mxu0 0.0
    %488 = vmatpush1.msra.mxu0 0.0
    %489 = vmatprep.subr.mxu0 0.0
    %490 = vmatpush1.msra.mxu0 0.0
    %491 = vmatprep.subr.mxu0 0.0
    %492 = vmatpush1.msra.mxu0 0.0
    %493 = vmatprep.subr.mxu0 0.0
    %494 = vmatpush1.msra.mxu0 0.0
    %495 = vmatprep.subr.mxu0 0.0
    %496 = vmatpush1.msra.mxu0 0.0
    %497 = vmatprep.mubr.f32.mxu0 0.0
    %498 = vmatmul.mubr.f32.gmra.mrb[0].mxu0 %v431
    %v499 = vpop.f32.mrb[0].mxu0
    %v500 = vadd.f32 %v53, %v499
    %v501 = vpop.f32.mrb[0].mxu0
    %502 = vdwg.mxu0
    %v503 = vxor.u32 %v500, 2147483648
    %v504 = vmul.f32 %v503, 1.442695
    %v505 = vpow.pop %v504
    %v506 = vadd.f32 %v505, 1.0
    %v507 = vrcp.pop %v506
    %v508 = vmul.f32 1.0, %v507
    %v509 = vtanh.pop %v500
    %v510 = vsel %vm142, %v508, %v509
    %v511 = vmul.f32 %v510, %v402
    %513 = vrot.lane.b32.xlu0 %v510, 32
    %v514 = vpop.permute.xlu0 %513
    %v516 = vmul.f32 %v510, %v514
    %518 = vrot.lane.b32.xlu0 %v516, 32
    %v519 = vpop.permute.xlu0 %518
    %v521 = vadd.f32 %v511, %v519
    %v522 = vtanh.pop %v521
    %524 = vrot.lane.b32.xlu0 %v522, 32
    %v525 = vpop.permute.xlu0 %524
    %v527 = vmul.f32 %v510, %v525
    %s528 = scalar_lea.vmem %s0, 8
    %v529 = vld [vmem:[%s528] sm:$0x3]
    %531 = vrot.lane.b32.xlu0 %v527, 68
    %v532 = vpop.permute.xlu0 %531
    %v534 = vsel %vm55, %v529, %v532
    %v535 = vsel %vm62, %v534, 0.0
    %536 = vrot.lane.b32.xlu0 %v527, 100
    %v537 = vpop.permute.xlu0 %536
    %v539 = vrot.slane %v527, 2
    %540 = vrot.lane.b32.xlu0 %v539, 4
    %v541 = vpop.permute.xlu0 %540
    %v543 = vsel %vm62, 0.0, %v537
    %v544 = vsel %vm180, %v543, %v541
    %v546 = vrot.slane %v544, 6
    %v548 = vsel %vm185, %v535, %v546
    %v550 = vsel %vm188, %v548, 0
    %552 = vmatprep.subr.mxu0 0.0
    %553 = vmatpush1.msra.mxu0 %v40
    %554 = vmatprep.subr.mxu0 0.0
    %555 = vmatpush1.msra.mxu0 %v41
    %556 = vmatprep.subr.mxu0 0.0
    %557 = vmatpush1.msra.mxu0 %v42
    %558 = vmatprep.subr.mxu0 0.0
    %559 = vmatpush1.msra.mxu0 %v43
    %560 = vmatprep.subr.mxu0 0.0
    %561 = vmatpush1.msra.mxu0 %v44
    %562 = vmatprep.subr.mxu0 0.0
    %563 = vmatpush1.msra.mxu0 %v45
    %564 = vmatprep.subr.mxu0 0.0
    %565 = vmatpush1.msra.mxu0 %v46
    %566 = vmatprep.subr.mxu0 0.0
    %567 = vmatpush1.msra.mxu0 %v47
    %568 = vmatprep.subr.mxu0 0.0
    %569 = vmatpush1.msra.mxu0 %v48
    %570 = vmatprep.subr.mxu0 0.0
    %571 = vmatpush1.msra.mxu0 %v49
    %572 = vmatprep.subr.mxu0 0.0
    %573 = vmatpush1.msra.mxu0 %v50
    %574 = vmatprep.subr.mxu0 0.0
    %575 = vmatpush1.msra.mxu0 %v51
    %576 = vmatprep.subr.mxu0 0.0
    %577 = vmatpush1.msra.mxu0 %v193
    %578 = vmatprep.subr.mxu0 0.0
    %579 = vmatpush1.msra.mxu0 0.0
    %580 = vmatprep.subr.mxu0 0.0
    %581 = vmatpush1.msra.mxu0 0.0
    %582 = vmatprep.subr.mxu0 0.0
    %583 = vmatpush1.msra.mxu0 0.0
    %584 = vmatprep.subr.mxu0 0.0
    %585 = vmatpush1.msra.mxu0 0.0
    %586 = vmatprep.subr.mxu0 0.0
    %587 = vmatpush1.msra.mxu0 0.0
    %588 = vmatprep.subr.mxu0 0.0
    %589 = vmatpush1.msra.mxu0 0.0
    %590 = vmatprep.subr.mxu0 0.0
    %591 = vmatpush1.msra.mxu0 0.0
    %592 = vmatprep.subr.mxu0 0.0
    %593 = vmatpush1.msra.mxu0 0.0
    %594 = vmatprep.subr.mxu0 0.0
    %595 = vmatpush1.msra.mxu0 0.0
    %596 = vmatprep.subr.mxu0 0.0
    %597 = vmatpush1.msra.mxu0 0.0
    %598 = vmatprep.subr.mxu0 0.0
    %599 = vmatpush1.msra.mxu0 0.0
    %600 = vmatprep.subr.mxu0 0.0
    %601 = vmatpush1.msra.mxu0 0.0
    %602 = vmatprep.subr.mxu0 0.0
    %603 = vmatpush1.msra.mxu0 0.0
    %604 = vmatprep.subr.mxu0 0.0
    %605 = vmatpush1.msra.mxu0 0.0
    %606 = vmatprep.subr.mxu0 0.0
    %607 = vmatpush1.msra.mxu0 0.0
    %608 = vmatprep.subr.mxu0 0.0
    %609 = vmatpush1.msra.mxu0 0.0
    %610 = vmatprep.subr.mxu0 0.0
    %611 = vmatpush1.msra.mxu0 0.0
    %612 = vmatprep.subr.mxu0 0.0
    %613 = vmatpush1.msra.mxu0 0.0
    %614 = vmatprep.subr.mxu0 0.0
    %615 = vmatpush1.msra.mxu0 0.0
    %616 = vmatprep.mubr.f32.mxu0 0.0
    %617 = vmatmul.mubr.f32.gmra.mrb[0].mxu0 %v550
    %v618 = vpop.f32.mrb[0].mxu0
    %v619 = vadd.f32 %v53, %v618
    %v620 = vpop.f32.mrb[0].mxu0
    %621 = vdwg.mxu0
    %v622 = vxor.u32 %v619, 2147483648
    %v623 = vmul.f32 %v622, 1.442695
    %v624 = vpow.pop %v623
    %v625 = vadd.f32 %v624, 1.0
    %v626 = vrcp.pop %v625
    %v627 = vmul.f32 1.0, %v626
    %v628 = vtanh.pop %v619
    %v629 = vsel %vm142, %v627, %v628
    %v630 = vmul.f32 %v629, %v521
    %632 = vrot.lane.b32.xlu0 %v629, 32
    %v633 = vpop.permute.xlu0 %632
    %v635 = vmul.f32 %v629, %v633
    %637 = vrot.lane.b32.xlu0 %v635, 32
    %v638 = vpop.permute.xlu0 %637
    %v640 = vadd.f32 %v630, %v638
    %v641 = vtanh.pop %v640
    %643 = vrot.lane.b32.xlu0 %v641, 32
    %v644 = vpop.permute.xlu0 %643
    %v646 = vmul.f32 %v629, %v644
    %s647 = scalar_lea.vmem %s0, 10
    %v648 = vld [vmem:[%s647] sm:$0x3]
    %650 = vrot.lane.b32.xlu0 %v646, 68
    %v651 = vpop.permute.xlu0 %650
    %v653 = vsel %vm55, %v648, %v651
    %v654 = vsel %vm62, %v653, 0.0
    %655 = vrot.lane.b32.xlu0 %v646, 100
    %v656 = vpop.permute.xlu0 %655
    %v658 = vrot.slane %v646, 2
    %659 = vrot.lane.b32.xlu0 %v658, 4
    %v660 = vpop.permute.xlu0 %659
    %v662 = vsel %vm62, 0.0, %v656
    %v663 = vsel %vm180, %v662, %v660
    %v665 = vrot.slane %v663, 6
    %v667 = vsel %vm185, %v654, %v665
    %v669 = vsel %vm188, %v667, 0
    %671 = vmatprep.subr.mxu0 0.0
    %672 = vmatpush1.msra.mxu0 %v40
    %673 = vmatprep.subr.mxu0 0.0
    %674 = vmatpush1.msra.mxu0 %v41
    %675 = vmatprep.subr.mxu0 0.0
    %676 = vmatpush1.msra.mxu0 %v42
    %677 = vmatprep.subr.mxu0 0.0
    %678 = vmatpush1.msra.mxu0 %v43
    %679 = vmatprep.subr.mxu0 0.0
    %680 = vmatpush1.msra.mxu0 %v44
    %681 = vmatprep.subr.mxu0 0.0
    %682 = vmatpush1.msra.mxu0 %v45
    %683 = vmatprep.subr.mxu0 0.0
    %684 = vmatpush1.msra.mxu0 %v46
    %685 = vmatprep.subr.mxu0 0.0
    %686 = vmatpush1.msra.mxu0 %v47
    %687 = vmatprep.subr.mxu0 0.0
    %688 = vmatpush1.msra.mxu0 %v48
    %689 = vmatprep.subr.mxu0 0.0
    %690 = vmatpush1.msra.mxu0 %v49
    %691 = vmatprep.subr.mxu0 0.0
    %692 = vmatpush1.msra.mxu0 %v50
    %693 = vmatprep.subr.mxu0 0.0
    %694 = vmatpush1.msra.mxu0 %v51
    %695 = vmatprep.subr.mxu0 0.0
    %696 = vmatpush1.msra.mxu0 %v193
    %697 = vmatprep.subr.mxu0 0.0
    %698 = vmatpush1.msra.mxu0 0.0
    %699 = vmatprep.subr.mxu0 0.0
    %700 = vmatpush1.msra.mxu0 0.0
    %701 = vmatprep.subr.mxu0 0.0
    %702 = vmatpush1.msra.mxu0 0.0
    %703 = vmatprep.subr.mxu0 0.0
    %704 = vmatpush1.msra.mxu0 0.0
    %705 = vmatprep.subr.mxu0 0.0
    %706 = vmatpush1.msra.mxu0 0.0
    %707 = vmatprep.subr.mxu0 0.0
    %708 = vmatpush1.msra.mxu0 0.0
    %709 = vmatprep.subr.mxu0 0.0
    %710 = vmatpush1.msra.mxu0 0.0
    %711 = vmatprep.subr.mxu0 0.0
    %712 = vmatpush1.msra.mxu0 0.0
    %713 = vmatprep.subr.mxu0 0.0
    %714 = vmatpush1.msra.mxu0 0.0
    %715 = vmatprep.subr.mxu0 0.0
    %716 = vmatpush1.msra.mxu0 0.0
    %717 = vmatprep.subr.mxu0 0.0
    %718 = vmatpush1.msra.mxu0 0.0
    %719 = vmatprep.subr.mxu0 0.0
    %720 = vmatpush1.msra.mxu0 0.0
    %721 = vmatprep.subr.mxu0 0.0
    %722 = vmatpush1.msra.mxu0 0.0
    %723 = vmatprep.subr.mxu0 0.0
    %724 = vmatpush1.msra.mxu0 0.0
    %725 = vmatprep.subr.mxu0 0.0
    %726 = vmatpush1.msra.mxu0 0.0
    %727 = vmatprep.subr.mxu0 0.0
    %728 = vmatpush1.msra.mxu0 0.0
    %729 = vmatprep.subr.mxu0 0.0
    %730 = vmatpush1.msra.mxu0 0.0
    %731 = vmatprep.subr.mxu0 0.0
    %732 = vmatpush1.msra.mxu0 0.0
    %733 = vmatprep.subr.mxu0 0.0
    %734 = vmatpush1.msra.mxu0 0.0
    %735 = vmatprep.mubr.f32.mxu0 0.0
    %736 = vmatmul.mubr.f32.gmra.mrb[0].mxu0 %v669
    %v737 = vpop.f32.mrb[0].mxu0
    %v738 = vadd.f32 %v53, %v737
    %v739 = vpop.f32.mrb[0].mxu0
    %740 = vdwg.mxu0
    %v741 = vxor.u32 %v738, 2147483648
    %v742 = vmul.f32 %v741, 1.442695
    %v743 = vpow.pop %v742
    %v744 = vadd.f32 %v743, 1.0
    %v745 = vrcp.pop %v744
    %v746 = vmul.f32 1.0, %v745
    %v747 = vtanh.pop %v738
    %v748 = vsel %vm142, %v746, %v747
    %v749 = vmul.f32 %v748, %v640
    %751 = vrot.lane.b32.xlu0 %v748, 32
    %v752 = vpop.permute.xlu0 %751
    %v754 = vmul.f32 %v748, %v752
    %756 = vrot.lane.b32.xlu0 %v754, 32
    %v757 = vpop.permute.xlu0 %756
    %v759 = vadd.f32 %v749, %v757
    %v760 = vtanh.pop %v759
    %762 = vrot.lane.b32.xlu0 %v760, 32
    %v763 = vpop.permute.xlu0 %762
    %v765 = vmul.f32 %v748, %v763
    %s766 = scalar_lea.vmem %s0, 12
    %v767 = vld [vmem:[%s766] sm:$0x3]
    %769 = vrot.lane.b32.xlu0 %v765, 68
    %v770 = vpop.permute.xlu0 %769
    %v772 = vsel %vm55, %v767, %v770
    %v773 = vsel %vm62, %v772, 0.0
    %774 = vrot.lane.b32.xlu0 %v765, 100
    %v775 = vpop.permute.xlu0 %774
    %v777 = vrot.slane %v765, 2
    %778 = vrot.lane.b32.xlu0 %v777, 4
    %v779 = vpop.permute.xlu0 %778
    %v781 = vsel %vm62, 0.0, %v775
    %v782 = vsel %vm180, %v781, %v779
    %v784 = vrot.slane %v782, 6
    %v786 = vsel %vm185, %v773, %v784
    %v788 = vsel %vm188, %v786, 0
    %790 = vmatprep.subr.mxu0 0.0
    %791 = vmatpush1.msra.mxu0 %v40
    %792 = vmatprep.subr.mxu0 0.0
    %793 = vmatpush1.msra.mxu0 %v41
    %794 = vmatprep.subr.mxu0 0.0
    %795 = vmatpush1.msra.mxu0 %v42
    %796 = vmatprep.subr.mxu0 0.0
    %797 = vmatpush1.msra.mxu0 %v43
    %798 = vmatprep.subr.mxu0 0.0
    %799 = vmatpush1.msra.mxu0 %v44
    %800 = vmatprep.subr.mxu0 0.0
    %801 = vmatpush1.msra.mxu0 %v45
    %802 = vmatprep.subr.mxu0 0.0
    %803 = vmatpush1.msra.mxu0 %v46
    %804 = vmatprep.subr.mxu0 0.0
    %805 = vmatpush1.msra.mxu0 %v47
    %806 = vmatprep.subr.mxu0 0.0
    %807 = vmatpush1.msra.mxu0 %v48
    %808 = vmatprep.subr.mxu0 0.0
    %809 = vmatpush1.msra.mxu0 %v49
    %810 = vmatprep.subr.mxu0 0.0
    %811 = vmatpush1.msra.mxu0 %v50
    %812 = vmatprep.subr.mxu0 0.0
    %813 = vmatpush1.msra.mxu0 %v51
    %814 = vmatprep.subr.mxu0 0.0
    %815 = vmatpush1.msra.mxu0 %v193
    %816 = vmatprep.subr.mxu0 0.0
    %817 = vmatpush1.msra.mxu0 0.0
    %818 = vmatprep.subr.mxu0 0.0
    %819 = vmatpush1.msra.mxu0 0.0
    %820 = vmatprep.subr.mxu0 0.0
    %821 = vmatpush1.msra.mxu0 0.0
    %822 = vmatprep.subr.mxu0 0.0
    %823 = vmatpush1.msra.mxu0 0.0
    %824 = vmatprep.subr.mxu0 0.0
    %825 = vmatpush1.msra.mxu0 0.0
    %826 = vmatprep.subr.mxu0 0.0
    %827 = vmatpush1.msra.mxu0 0.0
    %828 = vmatprep.subr.mxu0 0.0
    %829 = vmatpush1.msra.mxu0 0.0
    %830 = vmatprep.subr.mxu0 0.0
    %831 = vmatpush1.msra.mxu0 0.0
    %832 = vmatprep.subr.mxu0 0.0
    %833 = vmatpush1.msra.mxu0 0.0
    %834 = vmatprep.subr.mxu0 0.0
    %835 = vmatpush1.msra.mxu0 0.0
    %836 = vmatprep.subr.mxu0 0.0
    %837 = vmatpush1.msra.mxu0 0.0
    %838 = vmatprep.subr.mxu0 0.0
    %839 = vmatpush1.msra.mxu0 0.0
    %840 = vmatprep.subr.mxu0 0.0
    %841 = vmatpush1.msra.mxu0 0.0
    %842 = vmatprep.subr.mxu0 0.0
    %843 = vmatpush1.msra.mxu0 0.0
    %844 = vmatprep.subr.mxu0 0.0
    %845 = vmatpush1.msra.mxu0 0.0
    %846 = vmatprep.subr.mxu0 0.0
    %847 = vmatpush1.msra.mxu0 0.0
    %848 = vmatprep.subr.mxu0 0.0
    %849 = vmatpush1.msra.mxu0 0.0
    %850 = vmatprep.subr.mxu0 0.0
    %851 = vmatpush1.msra.mxu0 0.0
    %852 = vmatprep.subr.mxu0 0.0
    %853 = vmatpush1.msra.mxu0 0.0
    %854 = vmatprep.mubr.f32.mxu0 0.0
    %855 = vmatmul.mubr.f32.gmra.mrb[0].mxu0 %v788
    %v856 = vpop.f32.mrb[0].mxu0
    %v857 = vadd.f32 %v53, %v856
    %v858 = vpop.f32.mrb[0].mxu0
    %859 = vdwg.mxu0
    %v860 = vxor.u32 %v857, 2147483648
    %v861 = vmul.f32 %v860, 1.442695
    %v862 = vpow.pop %v861
    %v863 = vadd.f32 %v862, 1.0
    %v864 = vrcp.pop %v863
    %v865 = vmul.f32 1.0, %v864
    %v866 = vtanh.pop %v857
    %v867 = vsel %vm142, %v865, %v866
    %v868 = vmul.f32 %v867, %v759
    %870 = vrot.lane.b32.xlu0 %v867, 32
    %v871 = vpop.permute.xlu0 %870
    %v873 = vmul.f32 %v867, %v871
    %875 = vrot.lane.b32.xlu0 %v873, 32
    %v876 = vpop.permute.xlu0 %875
    %v878 = vadd.f32 %v868, %v876
    %v879 = vtanh.pop %v878
    %881 = vrot.lane.b32.xlu0 %v879, 32
    %v882 = vpop.permute.xlu0 %881
    %v884 = vmul.f32 %v867, %v882
    %s885 = scalar_lea.vmem %s0, 14
    %v886 = vld [vmem:[%s885] sm:$0x3]
    %888 = vrot.lane.b32.xlu0 %v884, 68
    %v889 = vpop.permute.xlu0 %888
    %v891 = vsel %vm55, %v886, %v889
    %v892 = vsel %vm62, %v891, 0.0
    %893 = vrot.lane.b32.xlu0 %v884, 100
    %v894 = vpop.permute.xlu0 %893
    %v896 = vrot.slane %v884, 2
    %897 = vrot.lane.b32.xlu0 %v896, 4
    %v898 = vpop.permute.xlu0 %897
    %v900 = vsel %vm62, 0.0, %v894
    %v901 = vsel %vm180, %v900, %v898
    %v903 = vrot.slane %v901, 6
    %v905 = vsel %vm185, %v892, %v903
    %v907 = vsel %vm188, %v905, 0
    %909 = vmatprep.subr.mxu0 0.0
    %910 = vmatpush1.msra.mxu0 %v40
    %911 = vmatprep.subr.mxu0 0.0
    %912 = vmatpush1.msra.mxu0 %v41
    %913 = vmatprep.subr.mxu0 0.0
    %914 = vmatpush1.msra.mxu0 %v42
    %915 = vmatprep.subr.mxu0 0.0
    %916 = vmatpush1.msra.mxu0 %v43
    %917 = vmatprep.subr.mxu0 0.0
    %918 = vmatpush1.msra.mxu0 %v44
    %919 = vmatprep.subr.mxu0 0.0
    %920 = vmatpush1.msra.mxu0 %v45
    %921 = vmatprep.subr.mxu0 0.0
    %922 = vmatpush1.msra.mxu0 %v46
    %923 = vmatprep.subr.mxu0 0.0
    %924 = vmatpush1.msra.mxu0 %v47
    %925 = vmatprep.subr.mxu0 0.0
    %926 = vmatpush1.msra.mxu0 %v48
    %927 = vmatprep.subr.mxu0 0.0
    %928 = vmatpush1.msra.mxu0 %v49
    %929 = vmatprep.subr.mxu0 0.0
    %930 = vmatpush1.msra.mxu0 %v50
    %931 = vmatprep.subr.mxu0 0.0
    %932 = vmatpush1.msra.mxu0 %v51
    %933 = vmatprep.subr.mxu0 0.0
    %934 = vmatpush1.msra.mxu0 %v193
    %935 = vmatprep.subr.mxu0 0.0
    %936 = vmatpush1.msra.mxu0 0.0
    %937 = vmatprep.subr.mxu0 0.0
    %938 = vmatpush1.msra.mxu0 0.0
    %939 = vmatprep.subr.mxu0 0.0
    %940 = vmatpush1.msra.mxu0 0.0
    %941 = vmatprep.subr.mxu0 0.0
    %942 = vmatpush1.msra.mxu0 0.0
    %943 = vmatprep.subr.mxu0 0.0
    %944 = vmatpush1.msra.mxu0 0.0
    %945 = vmatprep.subr.mxu0 0.0
    %946 = vmatpush1.msra.mxu0 0.0
    %947 = vmatprep.subr.mxu0 0.0
    %948 = vmatpush1.msra.mxu0 0.0
    %949 = vmatprep.subr.mxu0 0.0
    %950 = vmatpush1.msra.mxu0 0.0
    %951 = vmatprep.subr.mxu0 0.0
    %952 = vmatpush1.msra.mxu0 0.0
    %953 = vmatprep.subr.mxu0 0.0
    %954 = vmatpush1.msra.mxu0 0.0
    %955 = vmatprep.subr.mxu0 0.0
    %956 = vmatpush1.msra.mxu0 0.0
    %957 = vmatprep.subr.mxu0 0.0
    %958 = vmatpush1.msra.mxu0 0.0
    %959 = vmatprep.subr.mxu0 0.0
    %960 = vmatpush1.msra.mxu0 0.0
    %961 = vmatprep.subr.mxu0 0.0
    %962 = vmatpush1.msra.mxu0 0.0
    %963 = vmatprep.subr.mxu0 0.0
    %964 = vmatpush1.msra.mxu0 0.0
    %965 = vmatprep.subr.mxu0 0.0
    %966 = vmatpush1.msra.mxu0 0.0
    %967 = vmatprep.subr.mxu0 0.0
    %968 = vmatpush1.msra.mxu0 0.0
    %969 = vmatprep.subr.mxu0 0.0
    %970 = vmatpush1.msra.mxu0 0.0
    %971 = vmatprep.subr.mxu0 0.0
    %972 = vmatpush1.msra.mxu0 0.0
    %973 = vmatprep.mubr.f32.mxu0 0.0
    %974 = vmatmul.mubr.f32.gmra.mrb[0].mxu0 %v907
    %v975 = vpop.f32.mrb[0].mxu0
    %v976 = vadd.f32 %v53, %v975
    %v977 = vpop.f32.mrb[0].mxu0
    %978 = vdwg.mxu0
    %v979 = vxor.u32 %v976, 2147483648
    %v980 = vmul.f32 %v979, 1.442695
    %v981 = vpow.pop %v980
    %v982 = vadd.f32 %v981, 1.0
    %v983 = vrcp.pop %v982
    %v984 = vmul.f32 1.0, %v983
    %v985 = vtanh.pop %v976
    %v986 = vsel %vm142, %v984, %v985
    %v987 = vmul.f32 %v986, %v878
    %989 = vrot.lane.b32.xlu0 %v986, 32
    %v990 = vpop.permute.xlu0 %989
    %v992 = vmul.f32 %v986, %v990
    %994 = vrot.lane.b32.xlu0 %v992, 32
    %v995 = vpop.permute.xlu0 %994
    %v997 = vadd.f32 %v987, %v995
    %v998 = vtanh.pop %v997
    %1000 = vrot.lane.b32.xlu0 %v998, 32
    %v1001 = vpop.permute.xlu0 %1000
    %v1003 = vmul.f32 %v986, %v1001
    %1005 = vrot.lane.b32.xlu0 %v1003, 64
    %v1006 = vpop.permute.xlu0 %1005
    %v1008 = vrot.slane %v1003, 2
    %1009 = vrot.lane.b32.xlu0 %v1008, 96
    %v1010 = vpop.permute.xlu0 %1009
    %vm1012 = vcmask 261120
    %v1013 = vsel %vm1012, %v1006, %v1010
    %v1014 = vld [vmem:[#allocation2 + $0x24] sm:$0xff]
    %v1015 = vld [vmem:[#allocation2 + $0x2c] sm:$0xff]
    %v1016 = vld [vmem:[#allocation2 + $0x34] sm:$0xff]
    %v1017 = vld [vmem:[#allocation2 + $0x3c] sm:$0xff]
    %v1018 = vld [vmem:[#allocation2 + $0x44] sm:$0xff]
    %v1019 = vld [vmem:[#allocation2 + $0x4c] sm:$0xff]
    %v1020 = vld [vmem:[#allocation2 + $0x54] sm:$0xff]
    %v1021 = vld [vmem:[#allocation2 + $0x5c] sm:$0xff]
    %v1023 = vrot.slane %v53, 2
    %vm1025 = vcmask 523264
    %v1027 = vsel %vm1025, %v1013, 0
    %1029 = vmatprep.subr.mxu0 0.0
    %1030 = vmatpush1.msra.mxu0 %v1014
    %1031 = vmatprep.subr.mxu0 0.0
    %1032 = vmatpush1.msra.mxu0 %v1015
    %1033 = vmatprep.subr.mxu0 0.0
    %1034 = vmatpush1.msra.mxu0 %v1016
    %1035 = vmatprep.subr.mxu0 0.0
    %1036 = vmatpush1.msra.mxu0 %v1017
    %1037 = vmatprep.subr.mxu0 0.0
    %1038 = vmatpush1.msra.mxu0 %v1018
    %1039 = vmatprep.subr.mxu0 0.0
    %1040 = vmatpush1.msra.mxu0 %v1019
    %1041 = vmatprep.subr.mxu0 0.0
    %1042 = vmatpush1.msra.mxu0 %v1020
    %1043 = vmatprep.subr.mxu0 0.0
    %1044 = vmatpush1.msra.mxu0 %v1021
    %1045 = vmatprep.subr.mxu0 0.0
    %1046 = vmatpush1.msra.mxu0 0.0
    %1047 = vmatprep.subr.mxu0 0.0
    %1048 = vmatpush1.msra.mxu0 0.0
    %1049 = vmatprep.subr.mxu0 0.0
    %1050 = vmatpush1.msra.mxu0 0.0
    %1051 = vmatprep.subr.mxu0 0.0
    %1052 = vmatpush1.msra.mxu0 0.0
    %1053 = vmatprep.subr.mxu0 0.0
    %1054 = vmatpush1.msra.mxu0 0.0
    %1055 = vmatprep.subr.mxu0 0.0
    %1056 = vmatpush1.msra.mxu0 0.0
    %1057 = vmatprep.subr.mxu0 0.0
    %1058 = vmatpush1.msra.mxu0 0.0
    %1059 = vmatprep.subr.mxu0 0.0
    %1060 = vmatpush1.msra.mxu0 0.0
    %1061 = vmatprep.subr.mxu0 0.0
    %1062 = vmatpush1.msra.mxu0 0.0
    %1063 = vmatprep.subr.mxu0 0.0
    %1064 = vmatpush1.msra.mxu0 0.0
    %1065 = vmatprep.subr.mxu0 0.0
    %1066 = vmatpush1.msra.mxu0 0.0
    %1067 = vmatprep.subr.mxu0 0.0
    %1068 = vmatpush1.msra.mxu0 0.0
    %1069 = vmatprep.subr.mxu0 0.0
    %1070 = vmatpush1.msra.mxu0 0.0
    %1071 = vmatprep.subr.mxu0 0.0
    %1072 = vmatpush1.msra.mxu0 0.0
    %1073 = vmatprep.subr.mxu0 0.0
    %1074 = vmatpush1.msra.mxu0 0.0
    %1075 = vmatprep.subr.mxu0 0.0
    %1076 = vmatpush1.msra.mxu0 0.0
    %1077 = vmatprep.subr.mxu0 0.0
    %1078 = vmatpush1.msra.mxu0 0.0
    %1079 = vmatprep.subr.mxu0 0.0
    %1080 = vmatpush1.msra.mxu0 0.0
    %1081 = vmatprep.subr.mxu0 0.0
    %1082 = vmatpush1.msra.mxu0 0.0
    %1083 = vmatprep.subr.mxu0 0.0
    %1084 = vmatpush1.msra.mxu0 0.0
    %1085 = vmatprep.subr.mxu0 0.0
    %1086 = vmatpush1.msra.mxu0 0.0
    %1087 = vmatprep.subr.mxu0 0.0
    %1088 = vmatpush1.msra.mxu0 0.0
    %1089 = vmatprep.subr.mxu0 0.0
    %1090 = vmatpush1.msra.mxu0 0.0
    %1091 = vmatprep.subr.mxu0 0.0
    %1092 = vmatpush1.msra.mxu0 0.0
    %1093 = vmatprep.mubr.f32.mxu0 0.0
    %1094 = vmatmul.mubr.f32.gmra.mrb[0].mxu0 %v1027
    %v1095 = vpop.f32.mrb[0].mxu0
    %v1096 = vadd.f32 %v1023, %v1095
    %v1097 = vpop.f32.mrb[0].mxu0
    %1098 = vdwg.mxu0
    %v1099 = vxor.u32 %v1096, 2147483648
    %v1100 = vmul.f32 %v1099, 1.442695
    %v1101 = vpow.pop %v1100
    %v1102 = vadd.f32 %v1101, 1.0
    %v1103 = vrcp.pop %v1102
    %v1104 = vmul.f32 1.0, %v1103
    %v1105 = vtanh.pop %v1096
    %v1106 = vsel %vm142, %v1104, %v1105
    %v1108 = vrot.slane %v997, 2
    %v1110 = vmul.f32 %v1106, %v1108
    %1112 = vrot.lane.b32.xlu0 %v1106, 32
    %v1113 = vpop.permute.xlu0 %1112
    %v1115 = vmul.f32 %v1106, %v1113
    %1117 = vrot.lane.b32.xlu0 %v1115, 32
    %v1118 = vpop.permute.xlu0 %1117
    %v1120 = vadd.f32 %v1110, %v1118
    %v1121 = vtanh.pop %v1120
    %1123 = vrot.lane.b32.xlu0 %v1121, 32
    %v1124 = vpop.permute.xlu0 %1123
    %v1126 = vmul.f32 %v1106, %v1124
    %v1128 = vrot.slane %v527, 6
    %v1130 = vrot.slane %v646, 4
    %v1133 = vrot.slane %v1003, 6
    %v1136 = vrot.slane %v1126, 2
    %v1138 = vsel %vm185, %v301, %v408
    %v1139 = vsel %vm66, %v1138, %v1128
    %vm1140 = vcmask 1045504
    %v1141 = vsel %vm1140, %v1139, %v1130
    %v1142 = vsel %vm185, %v777, %v884
    %v1143 = vsel %vm66, %v1142, %v1133
    %v1144 = vsel %vm1140, %v1143, %v1136
    %v1145 = vld [vmem:[%s3] sm:$0xff]
    %v1146 = vld [vmem:[%s3 + $0x8] sm:$0xff]
    %v1147 = vld [vmem:[%s3 + $0x10] sm:$0xff]
    %v1148 = vld [vmem:[%s3 + $0x18] sm:$0xff]
    %v1149 = vld [vmem:[%s4] sm:$0x1]
    %v1151 = vlaneseq
    %v1152 = vshrl.u32 %v1151, 7
    %v1153 = vsub.s32 0, %v1152
    %v1154 = vrot.slane %v1149, %v1153
    %1158 = vrot.lane.b32.xlu0 %v1141, 64
    %v1159 = vpop.permute.xlu0 %1158
    %1160 = vrot.lane.b32.xlu0 %v1144, 64
    %v1161 = vpop.permute.xlu0 %1160
    %v1162 = vsel %vm1012, %v1159, 0
    %v1164 = vsel %vm1012, %v1161, 0
    %1166 = vmatprep.subr.mxu0 0.0
    %1167 = vmatpush1.msra.mxu0 %v1145
    %1168 = vmatprep.subr.mxu0 0.0
    %1169 = vmatpush1.msra.mxu0 %v1146
    %1170 = vmatprep.subr.mxu0 0.0
    %1171 = vmatpush1.msra.mxu0 %v1147
    %1172 = vmatprep.subr.mxu0 0.0
    %1173 = vmatpush1.msra.mxu0 %v1148
    %1174 = vmatprep.subr.mxu0 0.0
    %1175 = vmatpush1.msra.mxu0 0.0
    %1176 = vmatprep.subr.mxu0 0.0
    %1177 = vmatpush1.msra.mxu0 0.0
    %1178 = vmatprep.subr.mxu0 0.0
    %1179 = vmatpush1.msra.mxu0 0.0
    %1180 = vmatprep.subr.mxu0 0.0
    %1181 = vmatpush1.msra.mxu0 0.0
    %1182 = vmatprep.subr.mxu0 0.0
    %1183 = vmatpush1.msra.mxu0 0.0
    %1184 = vmatprep.subr.mxu0 0.0
    %1185 = vmatpush1.msra.mxu0 0.0
    %1186 = vmatprep.subr.mxu0 0.0
    %1187 = vmatpush1.msra.mxu0 0.0
    %1188 = vmatprep.subr.mxu0 0.0
    %1189 = vmatpush1.msra.mxu0 0.0
    %1190 = vmatprep.subr.mxu0 0.0
    %1191 = vmatpush1.msra.mxu0 0.0
    %1192 = vmatprep.subr.mxu0 0.0
    %1193 = vmatpush1.msra.mxu0 0.0
    %1194 = vmatprep.subr.mxu0 0.0
    %1195 = vmatpush1.msra.mxu0 0.0
    %1196 = vmatprep.subr.mxu0 0.0
    %1197 = vmatpush1.msra.mxu0 0.0
    %1198 = vmatprep.subr.mxu0 0.0
    %1199 = vmatpush1.msra.mxu0 0.0
    %1200 = vmatprep.subr.mxu0 0.0
    %1201 = vmatpush1.msra.mxu0 0.0
    %1202 = vmatprep.subr.mxu0 0.0
    %1203 = vmatpush1.msra.mxu0 0.0
    %1204 = vmatprep.subr.mxu0 0.0
    %1205 = vmatpush1.msra.mxu0 0.0
    %1206 = vmatprep.subr.mxu0 0.0
    %1207 = vmatpush1.msra.mxu0 0.0
    %1208 = vmatprep.subr.mxu0 0.0
    %1209 = vmatpush1.msra.mxu0 0.0
    %1210 = vmatprep.subr.mxu0 0.0
    %1211 = vmatpush1.msra.mxu0 0.0
    %1212 = vmatprep.subr.mxu0 0.0
    %1213 = vmatpush1.msra.mxu0 0.0
    %1214 = vmatprep.subr.mxu0 0.0
    %1215 = vmatpush1.msra.mxu0 0.0
    %1216 = vmatprep.subr.mxu0 0.0
    %1217 = vmatpush1.msra.mxu0 0.0
    %1218 = vmatprep.subr.mxu0 0.0
    %1219 = vmatpush1.msra.mxu0 0.0
    %1220 = vmatprep.subr.mxu0 0.0
    %1221 = vmatpush1.msra.mxu0 0.0
    %1222 = vmatprep.subr.mxu0 0.0
    %1223 = vmatpush1.msra.mxu0 0.0
    %1224 = vmatprep.subr.mxu0 0.0
    %1225 = vmatpush1.msra.mxu0 0.0
    %1226 = vmatprep.subr.mxu0 0.0
    %1227 = vmatpush1.msra.mxu0 0.0
    %1228 = vmatprep.subr.mxu0 0.0
    %1229 = vmatpush1.msra.mxu0 0.0
    %1230 = vmatprep.mubr.f32.mxu0 0.0
    %1231 = vmatmul.mubr.f32.gmra.mrb[0].mxu0 %v1162
    %v1232 = vpop.f32.mrb[0].mxu0
    %v1233 = vadd.f32 %v1154, %v1232
    %v1234 = vpop.f32.mrb[0].mxu0
    %1235 = vmatprep.mubr.f32.mxu0 0.0
    %1236 = vmatmul.mubr.f32.gmra.mrb[0].mxu0 %v1164
    %v1237 = vpop.f32.mrb[0].mxu0
    %v1238 = vadd.f32 %v1154, %v1237
    %v1239 = vpop.f32.mrb[0].mxu0
    %1240 = vdwg.mxu0
    %v1241 = vmax.f32 %v1233, 0.0
    %v1242 = vmax.f32 %v1238, 0.0
    %v1243 = vld [vmem:[%s5] sm:$0xff]
    %v1244 = vld [vmem:[%s6] sm:$0xff]
    %1246 = vset.pattern.permute.xlu0 0
    %1247 = vperm.xlu0 %1246, %v1244
    %v1248 = vpop.permute.xlu0 %1247
    %vm1250 = vcmask 130048
    %v1252 = vsel %vm1250, %v1243, 0
    %1254 = vmatprep.subr.mxu0 0.0
    %1255 = vmatpush1.msra.mxu0 %v1241
    %1256 = vmatprep.subr.mxu0 0.0
    %1257 = vmatpush1.msra.mxu0 %v1242
    %1258 = vmatprep.subr.mxu0 0.0
    %1259 = vmatpush1.msra.mxu0 0.0
    %1260 = vmatprep.subr.mxu0 0.0
    %1261 = vmatpush1.msra.mxu0 0.0
    %1262 = vmatprep.subr.mxu0 0.0
    %1263 = vmatpush1.msra.mxu0 0.0
    %1264 = vmatprep.subr.mxu0 0.0
    %1265 = vmatpush1.msra.mxu0 0.0
    %1266 = vmatprep.subr.mxu0 0.0
    %1267 = vmatpush1.msra.mxu0 0.0
    %1268 = vmatprep.subr.mxu0 0.0
    %1269 = vmatpush1.msra.mxu0 0.0
    %1270 = vmatprep.subr.mxu0 0.0
    %1271 = vmatpush1.msra.mxu0 0.0
    %1272 = vmatprep.subr.mxu0 0.0
    %1273 = vmatpush1.msra.mxu0 0.0
    %1274 = vmatprep.subr.mxu0 0.0
    %1275 = vmatpush1.msra.mxu0 0.0
    %1276 = vmatprep.subr.mxu0 0.0
    %1277 = vmatpush1.msra.mxu0 0.0
    %1278 = vmatprep.subr.mxu0 0.0
    %1279 = vmatpush1.msra.mxu0 0.0
    %1280 = vmatprep.subr.mxu0 0.0
    %1281 = vmatpush1.msra.mxu0 0.0
    %1282 = vmatprep.subr.mxu0 0.0
    %1283 = vmatpush1.msra.mxu0 0.0
    %1284 = vmatprep.subr.mxu0 0.0
    %1285 = vmatpush1.msra.mxu0 0.0
    %1286 = vmatprep.subr.mxu0 0.0
    %1287 = vmatpush1.msra.mxu0 0.0
    %1288 = vmatprep.subr.mxu0 0.0
    %1289 = vmatpush1.msra.mxu0 0.0
    %1290 = vmatprep.subr.mxu0 0.0
    %1291 = vmatpush1.msra.mxu0 0.0
    %1292 = vmatprep.subr.mxu0 0.0
    %1293 = vmatpush1.msra.mxu0 0.0
    %1294 = vmatprep.subr.mxu0 0.0
    %1295 = vmatpush1.msra.mxu0 0.0
    %1296 = vmatprep.subr.mxu0 0.0
    %1297 = vmatpush1.msra.mxu0 0.0
    %1298 = vmatprep.subr.mxu0 0.0
    %1299 = vmatpush1.msra.mxu0 0.0
    %1300 = vmatprep.subr.mxu0 0.0
    %1301 = vmatpush1.msra.mxu0 0.0
    %1302 = vmatprep.subr.mxu0 0.0
    %1303 = vmatpush1.msra.mxu0 0.0
    %1304 = vmatprep.subr.mxu0 0.0
    %1305 = vmatpush1.msra.mxu0 0.0
    %1306 = vmatprep.subr.mxu0 0.0
    %1307 = vmatpush1.msra.mxu0 0.0
    %1308 = vmatprep.subr.mxu0 0.0
    %1309 = vmatpush1.msra.mxu0 0.0
    %1310 = vmatprep.subr.mxu0 0.0
    %1311 = vmatpush1.msra.mxu0 0.0
    %1312 = vmatprep.subr.mxu0 0.0
    %1313 = vmatpush1.msra.mxu0 0.0
    %1314 = vmatprep.subr.mxu0 0.0
    %1315 = vmatpush1.msra.mxu0 0.0
    %1316 = vmatprep.subr.mxu0 0.0
    %1317 = vmatpush1.msra.mxu0 0.0
    %1318 = vmatprep.mubr.f32.mxu0 0.0
    %1319 = vmatmul.mubr.f32.gmra.mrb[0].mxu0 %v1252
    %v1320 = vpop.f32.mrb[0].mxu0
    %v1321 = vadd.f32 %v1248, %v1320
    %v1322 = vpop.f32.mrb[0].mxu0
    %1323 = vdwg.mxu0
    %1324 = vst.msk [vmem:[%s7] sm:$0xff] %vm55, %v1321
    // Predicated region
    $region34: #{tpu_custom_call.1} parent=1 // pred_check
      _
    $region35: #{tpu_custom_call.1} parent=1 // pred_check_branch
      %1326 = sbr.rel (0) target = $region37
    $region36: #{tpu_custom_call.1} parent=1 // pred_region
      _
    $region37: #{tpu_custom_call.1} parent=1 // pred_fallthru
      _
    // Predicated region
    $region38: #{tpu_custom_call.1} parent=1 // pred_check
      _
    $region39: #{tpu_custom_call.1} parent=1 // pred_check_branch
      %1328 = sbr.rel (0) target = $region41
    $region40: #{tpu_custom_call.1} parent=1 // pred_region
      _
    $region41: #{tpu_custom_call.1} parent=1 // pred_fallthru
      _
    %1329 = vsyncpa [#allocation3], 1

</llo_original>
